<compile_context>
chip_gen: v6e
topology: v6e:2x2x1
jax: 0.10.0
libtpu: 0.0.40
codegen_flags: <defaults>
</compile_context>

<pallas_src>
import jax
import jax.numpy as jnp
from jax.experimental import pallas as pl
from jax.experimental.pallas import tpu as pltpu

# Problem / module hyper-parameters (static for the kernel).
M = 32        # number of measurements (rows of A)
N = 64        # dictionary size (cols of A)
B = 256       # number of measurement column vectors (lane-dense batch)
STAGE = 3     # number of LISTA unrolled layers
ALPHA = 2.0   # step-size scaling (1/alpha applied to gradient term)
THR = 0.1     # soft-threshold value
TB = 256      # batch tile width (lane dim) -> grid collapses to one step at B=256


def _soft_thresh(x, thr):
    # x - clip(x, -thr, thr) == (x>thr)*(x-thr) + (x<-thr)*(x+thr)  (3 VALU ops)
    return x - jnp.clip(x, -thr, thr)


def lista_kernel(thr_ref,          # SMEM (STAGE,)           per-layer thresholds (scalar prefetch)
                 s_ref,            # VMEM (STAGE, 2N, 2N)    fused layer matrices S_k = I - Wt_k W_k
                 wt_ref,           # VMEM (STAGE*2N, 2M)     stacked (1/alpha) adjoint blocks
                 y_ref,            # VMEM (2M, TB)           stacked [yr; yi] batch tile
                 x_out):           # VMEM (2N, TB)           stacked [xr; xi] batch tile
    stage = s_ref.shape[0]
    two_n = s_ref.shape[1]

    # One batched dot for every layer's constant term c_k = Wt_k @ y.
    # (STAGE*2N, 2M) @ (2M, TB) -> (STAGE*2N, TB); independent of the layer chain.
    c_all = jnp.dot(wt_ref[...], y_ref[...], preferred_element_type=jnp.float32)

    # ---- initialization step (layer-0 parameters): x0 = soft(c_0, thr_0) ----
    x = _soft_thresh(c_all[:two_n, :], thr_ref[0])

    # ---- unrolled ISTA iterations: x <- soft(S_k x + c_k, thr_k) ----
    for layer in range(stage):
        c_k = c_all[layer * two_n:(layer + 1) * two_n, :]        # static 128-row slice
        z = jnp.dot(s_ref[layer], x, preferred_element_type=jnp.float32) + c_k
        x = _soft_thresh(z, thr_ref[layer])

    x_out[...] = x


def _build_fused_params(w_real, w_imag, alpha):
    """Build fused real-block parameters from per-layer A.real / A.imag.

    forward block  W  = [[Ar, -Ai], [Ai,  Ar]]                      (STAGE, 2M, 2N)
    adjoint block  Wt = (1/alpha) [[Ar^T, Ai^T], [-Ai^T, Ar^T]]     (STAGE, 2N, 2M)
    fused layer    S  = I - Wt @ W                                  (STAGE, 2N, 2N)
    """
    stage, m, n = w_real.shape
    W_blk = jnp.concatenate(
        [jnp.concatenate([w_real, -w_imag], axis=-1),
         jnp.concatenate([w_imag,  w_real], axis=-1)], axis=-2)
    wr_t = jnp.swapaxes(w_real, -1, -2)
    wi_t = jnp.swapaxes(w_imag, -1, -2)
    WT_blk = jnp.concatenate(
        [jnp.concatenate([wr_t,  wi_t], axis=-1),
         jnp.concatenate([-wi_t, wr_t], axis=-1)], axis=-2) * (1.0 / alpha)

    eye = jnp.eye(2 * n, dtype=jnp.float32)
    S_blk = eye[None] - jnp.einsum('snm,smk->snk', WT_blk, W_blk,
                                   precision=jax.lax.Precision.HIGHEST)
    WT_stack = WT_blk.reshape(stage * 2 * n, 2 * m)
    # NOTE: casting these two (and the y tile) to bfloat16 roughly halves MXU
    # passes / DMA bytes, at the cost of ~1e-2-level relative error.
    return S_blk.astype(jnp.float32), WT_stack.astype(jnp.float32)


@jax.jit
def lista_forward(w_real, w_imag, thresholds, y_real, y_imag):
    """w_real/w_imag: (STAGE, M, N), thresholds: (STAGE,), y_*: (M, B_any)."""
    stage, m, n = w_real.shape
    _, b = y_real.shape

    S_blk, WT_stack = _build_fused_params(w_real, w_imag, ALPHA)
    y_stack = jnp.concatenate([y_real, y_imag], axis=0)          # (2M, B)

    # Pad batch to a multiple of the lane tile so stores stay lane-dense.
    b_pad = ((b + TB - 1) // TB) * TB
    if b_pad != b:
        y_stack = jnp.pad(y_stack, ((0, 0), (0, b_pad - b)))
    num_tiles = b_pad // TB                                      # == 1 at B=256

    grid_spec = pltpu.PrefetchScalarGridSpec(
        num_scalar_prefetch=1,                    # thresholds -> SMEM
        grid=(num_tiles,),
        in_specs=[
            # Fused weights: same block for every grid step -> loaded once, resident.
            pl.BlockSpec((stage, 2 * n, 2 * n), lambda i, thr: (0, 0, 0)),
            pl.BlockSpec((stage * 2 * n, 2 * m), lambda i, thr: (0, 0)),
            # Stacked measurements: one lane-dense batch tile per step.
            pl.BlockSpec((2 * m, TB), lambda i, thr: (0, i)),
        ],
        out_specs=pl.BlockSpec((2 * n, TB), lambda i, thr: (0, i)),
    )

    x_stack = pl.pallas_call(
        lista_kernel,
        out_shape=jax.ShapeDtypeStruct((2 * n, b_pad), jnp.float32),
        grid_spec=grid_spec,
        compiler_params=pltpu.CompilerParams(
            dimension_semantics=("parallel",)),   # batch-tile axis (no-op at grid=(1,))
    )(thresholds, S_blk, WT_stack, y_stack)

    return x_stack[:n, :b], x_stack[n:, :b]


# ---------------------------------------------------------------------------
# Pure-JAX reference mirroring the PyTorch forward, for validation.
# ---------------------------------------------------------------------------
def _soft_comp_ref(x, thr):
    zero = jnp.zeros_like(x)
    return jnp.where(x > thr, x - thr, zero) + jnp.where(x < -thr, x + thr, zero)


def lista_reference(w_real, w_imag, thresholds, y_real, y_imag):
    alpha_inv = 1.0 / ALPHA
    Ar, Ai, thr = w_real[0], w_imag[0], thresholds[0]
    xr = _soft_comp_ref(alpha_inv * (Ar.T @ y_real + Ai.T @ y_imag), thr)
    xi = _soft_comp_ref(alpha_inv * (Ar.T @ y_imag - Ai.T @ y_real), thr)
    for layer in range(STAGE):
        Ar, Ai, thr = w_real[layer], w_imag[layer], thresholds[layer]
        rr = y_real - (Ar @ xr - Ai @ xi)
        ri = y_imag - (Ar @ xi + Ai @ xr)
        zr = xr + alpha_inv * (Ar.T @ rr + Ai.T @ ri)
        zi = xi + alpha_inv * (Ar.T @ ri - Ai.T @ rr)
        xr = _soft_comp_ref(zr, thr)
        xi = _soft_comp_ref(zi, thr)
    return xr, xi


if __name__ == "__main__":
    key = jax.random.PRNGKey(0)
    k_ar, k_ai, k_yr, k_yi = jax.random.split(key, 4)

    # Deterministic synthetic complex dictionary A = A_real + i*A_imag, (M, N).
    A_real = jax.random.normal(k_ar, (M, N), dtype=jnp.float32) / jnp.sqrt(M)
    A_imag = jax.random.normal(k_ai, (M, N), dtype=jnp.float32) / jnp.sqrt(M)

    # Per-layer parameters: every layer initialized from the same A / thr,
    # exactly as in LISTA.__init__.
    w_real = jnp.broadcast_to(A_real, (STAGE, M, N)).copy()
    w_imag = jnp.broadcast_to(A_imag, (STAGE, M, N)).copy()
    thresholds = jnp.full((STAGE,), THR, dtype=jnp.float32)

    # Measurements y = y_real + i*y_imag, columns of shape (M, B).
    y_real = jax.random.normal(k_yr, (M, B), dtype=jnp.float32)
    y_imag = jax.random.normal(k_yi, (M, B), dtype=jnp.float32)

    xr, xi = lista_forward(w_real, w_imag, thresholds, y_real, y_imag)
    jax.block_until_ready((xr, xi))

    # Sanity-check against the pure-JAX reference (fused form is algebraically
    # identical; tolerance covers f32 MXU rounding / reassociation).
    xr_ref, xi_ref = lista_reference(w_real, w_imag, thresholds, y_real, y_imag)
    assert jnp.allclose(xr, xr_ref, rtol=1e-2, atol=2e-3), "real part mismatch"
    assert jnp.allclose(xi, xi_ref, rtol=1e-2, atol=2e-3), "imag part mismatch"

    print("KERNEL_OK")
</pallas_src>

<mosaic_0001>
module attributes {stable_mosaic.version = 11 : i64} {
  func.func @lista_kernel(%arg0: i32, %arg1: memref<3xf32, #tpu.memory_space<smem>>, %arg2: memref<3x128x128xf32, #tpu.memory_space<vmem>>, %arg3: memref<384x64xf32, #tpu.memory_space<vmem>>, %arg4: memref<64x256xf32, #tpu.memory_space<vmem>>, %arg5: memref<128x256xf32, #tpu.memory_space<vmem>>) attributes {dimension_semantics = [#tpu.dimension_semantics<parallel>], iteration_bounds = array<i64: 1>, scalar_prefetch = 1 : i64, scratch_operands = 0 : i64, tpu.core_type = #tpu.core_type<tc>, window_params = [{pipeline_mode = #tpu.pipeline_mode<synchronous>, transform_indices = @transform_0, window_bounds = array<i64: 3, 128, 128>}, {pipeline_mode = #tpu.pipeline_mode<synchronous>, transform_indices = @transform_1, window_bounds = array<i64: 384, 64>}, {transform_indices = @transform_2, window_bounds = array<i64: 64, 256>}, {transform_indices = @transform_3, window_bounds = array<i64: 128, 256>}]} {
    %c0 = arith.constant 0 : index
    %c0_0 = arith.constant 0 : index
    %0 = vector.load %arg3[%c0, %c0_0] : memref<384x64xf32, #tpu.memory_space<vmem>>, vector<384x64xf32>
    %c0_1 = arith.constant 0 : index
    %c0_2 = arith.constant 0 : index
    %1 = vector.load %arg4[%c0_1, %c0_2] : memref<64x256xf32, #tpu.memory_space<vmem>>, vector<64x256xf32>
    %cst = arith.constant dense<0.000000e+00> : vector<384x256xf32>
    %2 = tpu.matmul %0, %1, %cst {dimension_numbers = #tpu.dot_dimension_numbers<[1], [0], [0], [1], [0, 0, 1, 1], [], []>} : vector<384x64xf32>, vector<64x256xf32>, vector<384x256xf32> -> vector<384x256xf32>
    %3 = vector.extract_strided_slice %2 {offsets = [0, 0], sizes = [128, 256], strides = [1, 1]} : vector<384x256xf32> to vector<128x256xf32>
    %c0_3 = arith.constant 0 : index
    %4 = memref.load %arg1[%c0_3] : memref<3xf32, #tpu.memory_space<smem>>
    %cst_4 = arith.constant 0.000000e+00 : f32
    %5 = arith.subf %cst_4, %4 : f32
    %6 = vector.broadcast %5 : f32 to vector<128x256xf32>
    %7 = arith.maximumf %6, %3 : vector<128x256xf32>
    %8 = vector.broadcast %4 : f32 to vector<128x256xf32>
    %9 = arith.minimumf %8, %7 : vector<128x256xf32>
    %10 = arith.subf %3, %9 : vector<128x256xf32>
    %11 = vector.extract_strided_slice %2 {offsets = [0, 0], sizes = [128, 256], strides = [1, 1]} : vector<384x256xf32> to vector<128x256xf32>
    %c0_5 = arith.constant 0 : index
    %c0_6 = arith.constant 0 : index
    %c0_7 = arith.constant 0 : index
    %12 = vector.load %arg2[%c0_5, %c0_6, %c0_7] : memref<3x128x128xf32, #tpu.memory_space<vmem>>, vector<1x128x128xf32>
    %13 = vector.shape_cast %12 : vector<1x128x128xf32> to vector<128x128xf32>
    %cst_8 = arith.constant dense<0.000000e+00> : vector<128x256xf32>
    %14 = tpu.matmul %13, %10, %cst_8 {dimension_numbers = #tpu.dot_dimension_numbers<[1], [0], [0], [1], [0, 0, 1, 1], [], []>} : vector<128x128xf32>, vector<128x256xf32>, vector<128x256xf32> -> vector<128x256xf32>
    %15 = arith.addf %14, %11 : vector<128x256xf32>
    %c0_9 = arith.constant 0 : index
    %16 = memref.load %arg1[%c0_9] : memref<3xf32, #tpu.memory_space<smem>>
    %cst_10 = arith.constant 0.000000e+00 : f32
    %17 = arith.subf %cst_10, %16 : f32
    %18 = vector.broadcast %17 : f32 to vector<128x256xf32>
    %19 = arith.maximumf %18, %15 : vector<128x256xf32>
    %20 = vector.broadcast %16 : f32 to vector<128x256xf32>
    %21 = arith.minimumf %20, %19 : vector<128x256xf32>
    %22 = arith.subf %15, %21 : vector<128x256xf32>
    %23 = vector.extract_strided_slice %2 {offsets = [128, 0], sizes = [128, 256], strides = [1, 1]} : vector<384x256xf32> to vector<128x256xf32>
    %c1 = arith.constant 1 : index
    %c0_11 = arith.constant 0 : index
    %c0_12 = arith.constant 0 : index
    %24 = vector.load %arg2[%c1, %c0_11, %c0_12] : memref<3x128x128xf32, #tpu.memory_space<vmem>>, vector<1x128x128xf32>
    %25 = vector.shape_cast %24 : vector<1x128x128xf32> to vector<128x128xf32>
    %cst_13 = arith.constant dense<0.000000e+00> : vector<128x256xf32>
    %26 = tpu.matmul %25, %22, %cst_13 {dimension_numbers = #tpu.dot_dimension_numbers<[1], [0], [0], [1], [0, 0, 1, 1], [], []>} : vector<128x128xf32>, vector<128x256xf32>, vector<128x256xf32> -> vector<128x256xf32>
    %27 = arith.addf %26, %23 : vector<128x256xf32>
    %c1_14 = arith.constant 1 : index
    %28 = memref.load %arg1[%c1_14] : memref<3xf32, #tpu.memory_space<smem>>
    %cst_15 = arith.constant 0.000000e+00 : f32
    %29 = arith.subf %cst_15, %28 : f32
    %30 = vector.broadcast %29 : f32 to vector<128x256xf32>
    %31 = arith.maximumf %30, %27 : vector<128x256xf32>
    %32 = vector.broadcast %28 : f32 to vector<128x256xf32>
    %33 = arith.minimumf %32, %31 : vector<128x256xf32>
    %34 = arith.subf %27, %33 : vector<128x256xf32>
    %35 = vector.extract_strided_slice %2 {offsets = [256, 0], sizes = [128, 256], strides = [1, 1]} : vector<384x256xf32> to vector<128x256xf32>
    %c2 = arith.constant 2 : index
    %c0_16 = arith.constant 0 : index
    %c0_17 = arith.constant 0 : index
    %36 = vector.load %arg2[%c2, %c0_16, %c0_17] : memref<3x128x128xf32, #tpu.memory_space<vmem>>, vector<1x128x128xf32>
    %37 = vector.shape_cast %36 : vector<1x128x128xf32> to vector<128x128xf32>
    %cst_18 = arith.constant dense<0.000000e+00> : vector<128x256xf32>
    %38 = tpu.matmul %37, %34, %cst_18 {dimension_numbers = #tpu.dot_dimension_numbers<[1], [0], [0], [1], [0, 0, 1, 1], [], []>} : vector<128x128xf32>, vector<128x256xf32>, vector<128x256xf32> -> vector<128x256xf32>
    %39 = arith.addf %38, %35 : vector<128x256xf32>
    %c2_19 = arith.constant 2 : index
    %40 = memref.load %arg1[%c2_19] : memref<3xf32, #tpu.memory_space<smem>>
    %cst_20 = arith.constant 0.000000e+00 : f32
    %41 = arith.subf %cst_20, %40 : f32
    %42 = vector.broadcast %41 : f32 to vector<128x256xf32>
    %43 = arith.maximumf %42, %39 : vector<128x256xf32>
    %44 = vector.broadcast %40 : f32 to vector<128x256xf32>
    %45 = arith.minimumf %44, %43 : vector<128x256xf32>
    %46 = arith.subf %39, %45 : vector<128x256xf32>
    %c0_21 = arith.constant 0 : index
    %c0_22 = arith.constant 0 : index
    %47 = vector.load %arg5[%c0_21, %c0_22] : memref<128x256xf32, #tpu.memory_space<vmem>>, vector<128x256xf32>
    tpu.vector_store %arg5[%c0_21, %c0_22], %46 {strides = array<i32>} : memref<128x256xf32, #tpu.memory_space<vmem>>, vector<128x256xf32>,
    return
  }
  func.func @transform_0(%arg0: i32, %arg1: memref<3xf32, #tpu.memory_space<smem>>) -> (i32, i32, i32) {
    %c0_i32 = arith.constant 0 : i32
    %c0_i32_0 = arith.constant 0 : i32
    %c0_i32_1 = arith.constant 0 : i32
    %c0_i32_2 = arith.constant 0 : i32
    return %c0_i32, %c0_i32_0, %c0_i32_1 : i32, i32, i32
  }
  func.func @transform_1(%arg0: i32, %arg1: memref<3xf32, #tpu.memory_space<smem>>) -> (i32, i32) {
    %c0_i32 = arith.constant 0 : i32
    %c0_i32_0 = arith.constant 0 : i32
    %c0_i32_1 = arith.constant 0 : i32
    return %c0_i32, %c0_i32_0 : i32, i32
  }
  func.func @transform_2(%arg0: i32, %arg1: memref<3xf32, #tpu.memory_space<smem>>) -> (i32, i32) {
    %c0_i32 = arith.constant 0 : i32
    %c0_i32_0 = arith.constant 0 : i32
    return %c0_i32, %arg0 : i32, i32
  }
  func.func @transform_3(%arg0: i32, %arg1: memref<3xf32, #tpu.memory_space<smem>>) -> (i32, i32) {
    %c0_i32 = arith.constant 0 : i32
    %c0_i32_0 = arith.constant 0 : i32
    return %c0_i32, %arg0 : i32, i32
  }
}

</mosaic_0001>

<llo_original>
// kernel: neg.2
$region0: #{neg.2}
  #allocation0 [shape = 's32[1]{0}', space=sflag, size = 0x4, scoped, tag = 'scoped memory for neg.2']
  %s0 = inlined_call_operand.vmem [shape: f32[3,32,64], index: 0, kind: input, shape index: {}]
  %s1 = inlined_call_operand.vmem [shape: f32[3,32,64], index: 1, kind: output, shape index: {}]
  %v2 = vld [vmem:[%s0] sm:$0xff]
  %3 = xla_tuple %v2
  %4 = xla_tuple %3
  %v5 = vxor.u32 %v2, 2147483648
  %6 = xla_tuple %v5
  %7 = vst [vmem:[%s1] sm:$0xff] %v5
  %s8 = scalar_lea.vmem %s0, 32
  %v9 = vld [vmem:[%s8] sm:$0xff]
  %10 = xla_tuple %v9
  %11 = xla_tuple %10
  %v12 = vxor.u32 %v9, 2147483648
  %13 = xla_tuple %v12
  %s14 = scalar_lea.vmem %s1, 32
  %15 = vst [vmem:[%s14] sm:$0xff] %v12
  %s16 = scalar_lea.vmem %s0, 64
  %v17 = vld [vmem:[%s16] sm:$0xff]
  %18 = xla_tuple %v17
  %19 = xla_tuple %18
  %v20 = vxor.u32 %v17, 2147483648
  %21 = xla_tuple %v20
  %s22 = scalar_lea.vmem %s1, 64
  %23 = vst [vmem:[%s22] sm:$0xff] %v20
  %s24 = scalar_lea.vmem %s0, 8
  %v25 = vld [vmem:[%s24] sm:$0xff]
  %26 = xla_tuple %v25
  %27 = xla_tuple %26
  %v28 = vxor.u32 %v25, 2147483648
  %29 = xla_tuple %v28
  %s30 = scalar_lea.vmem %s1, 8
  %31 = vst [vmem:[%s30] sm:$0xff] %v28
  %s32 = scalar_lea.vmem %s0, 40
  %v33 = vld [vmem:[%s32] sm:$0xff]
  %34 = xla_tuple %v33
  %35 = xla_tuple %34
  %v36 = vxor.u32 %v33, 2147483648
  %37 = xla_tuple %v36
  %s38 = scalar_lea.vmem %s1, 40
  %39 = vst [vmem:[%s38] sm:$0xff] %v36
  %s40 = scalar_lea.vmem %s0, 72
  %v41 = vld [vmem:[%s40] sm:$0xff]
  %42 = xla_tuple %v41
  %43 = xla_tuple %42
  %v44 = vxor.u32 %v41, 2147483648
  %45 = xla_tuple %v44
  %s46 = scalar_lea.vmem %s1, 72
  %47 = vst [vmem:[%s46] sm:$0xff] %v44
  %s48 = scalar_lea.vmem %s0, 16
  %v49 = vld [vmem:[%s48] sm:$0xff]
  %50 = xla_tuple %v49
  %51 = xla_tuple %50
  %v52 = vxor.u32 %v49, 2147483648
  %53 = xla_tuple %v52
  %s54 = scalar_lea.vmem %s1, 16
  %55 = vst [vmem:[%s54] sm:$0xff] %v52
  %s56 = scalar_lea.vmem %s0, 48
  %v57 = vld [vmem:[%s56] sm:$0xff]
  %58 = xla_tuple %v57
  %59 = xla_tuple %58
  %v60 = vxor.u32 %v57, 2147483648
  %61 = xla_tuple %v60
  %s62 = scalar_lea.vmem %s1, 48
  %63 = vst [vmem:[%s62] sm:$0xff] %v60
  %s64 = scalar_lea.vmem %s0, 80
  %v65 = vld [vmem:[%s64] sm:$0xff]
  %66 = xla_tuple %v65
  %67 = xla_tuple %66
  %v68 = vxor.u32 %v65, 2147483648
  %69 = xla_tuple %v68
  %s70 = scalar_lea.vmem %s1, 80
  %71 = vst [vmem:[%s70] sm:$0xff] %v68
  %s72 = scalar_lea.vmem %s0, 24
  %v73 = vld [vmem:[%s72] sm:$0xff]
  %74 = xla_tuple %v73
  %75 = xla_tuple %74
  %v76 = vxor.u32 %v73, 2147483648
  %77 = xla_tuple %v76
  %s78 = scalar_lea.vmem %s1, 24
  %79 = vst [vmem:[%s78] sm:$0xff] %v76
  %s80 = scalar_lea.vmem %s0, 56
  %v81 = vld [vmem:[%s80] sm:$0xff]
  %82 = xla_tuple %v81
  %83 = xla_tuple %82
  %v84 = vxor.u32 %v81, 2147483648
  %85 = xla_tuple %v84
  %s86 = scalar_lea.vmem %s1, 56
  %87 = vst [vmem:[%s86] sm:$0xff] %v84
  %s88 = scalar_lea.vmem %s0, 88
  %v89 = vld [vmem:[%s88] sm:$0xff]
  %90 = xla_tuple %v89
  %91 = xla_tuple %90
  %v92 = vxor.u32 %v89, 2147483648
  %93 = xla_tuple %v92
  %s94 = scalar_lea.vmem %s1, 88
  %95 = vst [vmem:[%s94] sm:$0xff] %v92

// kernel: lista_forward.1
$region0: #{lista_forward.1}
  #allocation0 [shape = 'u32[]', space=smem, size = 0x4, offset = 0x4, fixed_abs, tag = 'smem constant byte address 0x4 - core index']
  #allocation1 [shape = 'u32[144,128]{1,0:T(1,128)}', space=vmem, size = 0x12000, scoped, tag = 'internal scratch']
  #allocation2 [shape = 's32[1]{0}', space=sflag, size = 0x4, scoped, tag = 'scoped memory for lista_forward.1']
  #allocation3 [shape = 'u8[512]{0}', space=smem, size = 0x200, scoped, tag = 'prefetched SMEM operand 0']
  %s0 = inlined_call_operand.vmem [shape: f32[3], index: 0, kind: input, shape index: {}]
  %s1 = inlined_call_operand.vmem [shape: f32[3,128,128], index: 1, kind: input, shape index: {}]
  %s2 = inlined_call_operand.vmem [shape: f32[384,64], index: 2, kind: input, shape index: {}]
  %s3 = inlined_call_operand.vmem [shape: f32[64,256], index: 3, kind: input, shape index: {}]
  %s4 = inlined_call_operand.vmem [shape: f32[128,256], index: 4, kind: output, shape index: {}]
  %s5 = sld [smem:[#allocation0]]
  $region22: #{lista_forward.1} parent=0
    _
  %s7 = ssub.s32 1, %s5
  %s8 = scalar_select 0, %s7, %s5
  %s9 = sshll.u32 %s0, 4
  %s10 = int_to_ptr.vmem [resolvable:$true] %s9
  %12 = dma.vmem_to_smem %s10, 16, [#allocation3], [#allocation2]
  %13 = dma.done [#allocation2], 16
  %14 = sfence
  // Predicated region
  $region2: #{lista_forward.1} parent=0 // pred_check
    _
  $region3: #{lista_forward.1} parent=0 // pred_check_branch
    %16 = sbr.rel (0) target = $region5
  $region4: #{lista_forward.1} parent=0 // pred_region
    _
  $region5: #{lista_forward.1} parent=0 // pred_fallthru
    _
  // Predicated region
  $region6: #{lista_forward.1} parent=0 // pred_check
    _
  $region7: #{lista_forward.1} parent=0 // pred_check_branch
    %18 = sbr.rel (0) target = $region9
  $region8: #{lista_forward.1} parent=0 // pred_region
    _
  $region9: #{lista_forward.1} parent=0 // pred_fallthru
    _
  // Predicated region
  $region10: #{lista_forward.1} parent=0 // pred_check
    _
  $region11: #{lista_forward.1} parent=0 // pred_check_branch
    %20 = sbr.rel (0) target = $region13
  $region12: #{lista_forward.1} parent=0 // pred_region
    _
  $region13: #{lista_forward.1} parent=0 // pred_fallthru
    _
  %v21 = vld [vmem:[%s2] sm:$0xff]
  %v22 = vld [vmem:[%s2 + $0x8] sm:$0xff]
  %v23 = vld [vmem:[%s2 + $0x10] sm:$0xff]
  %v24 = vld [vmem:[%s2 + $0x18] sm:$0xff]
  %v25 = vld [vmem:[%s2 + $0x20] sm:$0xff]
  %v26 = vld [vmem:[%s2 + $0x28] sm:$0xff]
  %v27 = vld [vmem:[%s2 + $0x30] sm:$0xff]
  %v28 = vld [vmem:[%s2 + $0x38] sm:$0xff]
  %v29 = vld [vmem:[%s2 + $0x40] sm:$0xff]
  %v30 = vld [vmem:[%s2 + $0x48] sm:$0xff]
  %v31 = vld [vmem:[%s2 + $0x50] sm:$0xff]
  %v32 = vld [vmem:[%s2 + $0x58] sm:$0xff]
  %v33 = vld [vmem:[%s2 + $0x60] sm:$0xff]
  %v34 = vld [vmem:[%s2 + $0x68] sm:$0xff]
  %v35 = vld [vmem:[%s2 + $0x70] sm:$0xff]
  %v36 = vld [vmem:[%s2 + $0x78] sm:$0xff]
  %v37 = vld [vmem:[%s2 + $0x80] sm:$0xff]
  %v38 = vld [vmem:[%s2 + $0x88] sm:$0xff]
  %v39 = vld [vmem:[%s2 + $0x90] sm:$0xff]
  %v40 = vld [vmem:[%s2 + $0x98] sm:$0xff]
  %v41 = vld [vmem:[%s2 + $0xa0] sm:$0xff]
  %v42 = vld [vmem:[%s2 + $0xa8] sm:$0xff]
  %v43 = vld [vmem:[%s2 + $0xb0] sm:$0xff]
  %v44 = vld [vmem:[%s2 + $0xb8] sm:$0xff]
  %v45 = vld [vmem:[%s2 + $0xc0] sm:$0xff]
  %v46 = vld [vmem:[%s2 + $0xc8] sm:$0xff]
  %v47 = vld [vmem:[%s2 + $0xd0] sm:$0xff]
  %v48 = vld [vmem:[%s2 + $0xd8] sm:$0xff]
  %v49 = vld [vmem:[%s2 + $0xe0] sm:$0xff]
  %v50 = vld [vmem:[%s2 + $0xe8] sm:$0xff]
  %v51 = vld [vmem:[%s2 + $0xf0] sm:$0xff]
  %v52 = vld [vmem:[%s2 + $0xf8] sm:$0xff]
  %v53 = vld [vmem:[%s2 + $0x100] sm:$0xff]
  %v54 = vld [vmem:[%s2 + $0x108] sm:$0xff]
  %v55 = vld [vmem:[%s2 + $0x110] sm:$0xff]
  %v56 = vld [vmem:[%s2 + $0x118] sm:$0xff]
  %v57 = vld [vmem:[%s2 + $0x120] sm:$0xff]
  %v58 = vld [vmem:[%s2 + $0x128] sm:$0xff]
  %v59 = vld [vmem:[%s2 + $0x130] sm:$0xff]
  %v60 = vld [vmem:[%s2 + $0x138] sm:$0xff]
  %v61 = vld [vmem:[%s2 + $0x140] sm:$0xff]
  %v62 = vld [vmem:[%s2 + $0x148] sm:$0xff]
  %v63 = vld [vmem:[%s2 + $0x150] sm:$0xff]
  %v64 = vld [vmem:[%s2 + $0x158] sm:$0xff]
  %v65 = vld [vmem:[%s2 + $0x160] sm:$0xff]
  %v66 = vld [vmem:[%s2 + $0x168] sm:$0xff]
  %v67 = vld [vmem:[%s2 + $0x170] sm:$0xff]
  %v68 = vld [vmem:[%s2 + $0x178] sm:$0xff]
  %v69 = vld [vmem:[%s3] sm:$0xff]
  %v70 = vld [vmem:[%s3 + $0x8] sm:$0xff]
  %v71 = vld [vmem:[%s3 + $0x10] sm:$0xff]
  %v72 = vld [vmem:[%s3 + $0x18] sm:$0xff]
  %v73 = vld [vmem:[%s3 + $0x20] sm:$0xff]
  %v74 = vld [vmem:[%s3 + $0x28] sm:$0xff]
  %v75 = vld [vmem:[%s3 + $0x30] sm:$0xff]
  %v76 = vld [vmem:[%s3 + $0x38] sm:$0xff]
  %v77 = vld [vmem:[%s3 + $0x40] sm:$0xff]
  %v78 = vld [vmem:[%s3 + $0x48] sm:$0xff]
  %v79 = vld [vmem:[%s3 + $0x50] sm:$0xff]
  %v80 = vld [vmem:[%s3 + $0x58] sm:$0xff]
  %v81 = vld [vmem:[%s3 + $0x60] sm:$0xff]
  %v82 = vld [vmem:[%s3 + $0x68] sm:$0xff]
  %v83 = vld [vmem:[%s3 + $0x70] sm:$0xff]
  %v84 = vld [vmem:[%s3 + $0x78] sm:$0xff]
  %vm85 = vcmask 523264
  %v87 = vsel %vm85, %v21, 0
  %v90 = vsel %vm85, %v22, 0
  %v93 = vsel %vm85, %v23, 0
  %v96 = vsel %vm85, %v24, 0
  %v99 = vsel %vm85, %v25, 0
  %v102 = vsel %vm85, %v26, 0
  %v105 = vsel %vm85, %v27, 0
  %v108 = vsel %vm85, %v28, 0
  %v111 = vsel %vm85, %v29, 0
  %v114 = vsel %vm85, %v30, 0
  %v117 = vsel %vm85, %v31, 0
  %v120 = vsel %vm85, %v32, 0
  %v123 = vsel %vm85, %v33, 0
  %v126 = vsel %vm85, %v34, 0
  %v129 = vsel %vm85, %v35, 0
  %v132 = vsel %vm85, %v36, 0
  %v135 = vsel %vm85, %v37, 0
  %v138 = vsel %vm85, %v38, 0
  %v141 = vsel %vm85, %v39, 0
  %v144 = vsel %vm85, %v40, 0
  %v147 = vsel %vm85, %v41, 0
  %v150 = vsel %vm85, %v42, 0
  %v153 = vsel %vm85, %v43, 0
  %v156 = vsel %vm85, %v44, 0
  %v159 = vsel %vm85, %v45, 0
  %v162 = vsel %vm85, %v46, 0
  %v165 = vsel %vm85, %v47, 0
  %v168 = vsel %vm85, %v48, 0
  %v171 = vsel %vm85, %v49, 0
  %v174 = vsel %vm85, %v50, 0
  %v177 = vsel %vm85, %v51, 0
  %v180 = vsel %vm85, %v52, 0
  %v183 = vsel %vm85, %v53, 0
  %v186 = vsel %vm85, %v54, 0
  %v189 = vsel %vm85, %v55, 0
  %v192 = vsel %vm85, %v56, 0
  %v195 = vsel %vm85, %v57, 0
  %v198 = vsel %vm85, %v58, 0
  %v201 = vsel %vm85, %v59, 0
  %v204 = vsel %vm85, %v60, 0
  %v207 = vsel %vm85, %v61, 0
  %v210 = vsel %vm85, %v62, 0
  %v213 = vsel %vm85, %v63, 0
  %v216 = vsel %vm85, %v64, 0
  %v219 = vsel %vm85, %v65, 0
  %v222 = vsel %vm85, %v66, 0
  %v225 = vsel %vm85, %v67, 0
  %v228 = vsel %vm85, %v68, 0
  %230 = vmatprep.subr.mxu0 0.0
  %231 = vmatpush1.msra.mxu0 0.0
  %232 = vmatprep.subr.mxu0 0.0
  %233 = vmatpush1.msra.mxu0 0.0
  %234 = vmatprep.subr.mxu0 0.0
  %235 = vmatpush1.msra.mxu0 0.0
  %236 = vmatprep.subr.mxu0 0.0
  %237 = vmatpush1.msra.mxu0 0.0
  %238 = vmatprep.subr.mxu0 0.0
  %239 = vmatpush1.msra.mxu0 0.0
  %240 = vmatprep.subr.mxu0 0.0
  %241 = vmatpush1.msra.mxu0 0.0
  %242 = vmatprep.subr.mxu0 0.0
  %243 = vmatpush1.msra.mxu0 0.0
  %244 = vmatprep.subr.mxu0 0.0
  %245 = vmatpush1.msra.mxu0 0.0
  %246 = vmatprep.subr.mxu0 %v84
  %247 = vmatpush1.msra.mxu0 %v83
  %248 = vmatprep.subr.mxu0 %v82
  %249 = vmatpush1.msra.mxu0 %v81
  %250 = vmatprep.subr.mxu0 %v80
  %251 = vmatpush1.msra.mxu0 %v79
  %252 = vmatprep.subr.mxu0 %v78
  %253 = vmatpush1.msra.mxu0 %v77
  %254 = vmatprep.subr.mxu0 %v76
  %255 = vmatpush1.msra.mxu0 %v75
  %256 = vmatprep.subr.mxu0 %v74
  %257 = vmatpush1.msra.mxu0 %v73
  %258 = vmatprep.subr.mxu0 %v72
  %259 = vmatpush1.msra.mxu0 %v71
  %260 = vmatprep.subr.mxu0 %v70
  %261 = vmatpush1.msra.mxu0 %v69
  %262 = vmatprep.subr.mxu0 0.0
  %263 = vmatpush2.msra.mxu0 0.0
  %264 = vmatprep.subr.mxu0 0.0
  %265 = vmatpush2.msra.mxu0 0.0
  %266 = vmatprep.subr.mxu0 0.0
  %267 = vmatpush2.msra.mxu0 0.0
  %268 = vmatprep.subr.mxu0 0.0
  %269 = vmatpush2.msra.mxu0 0.0
  %270 = vmatprep.subr.mxu0 0.0
  %271 = vmatpush2.msra.mxu0 0.0
  %272 = vmatprep.subr.mxu0 0.0
  %273 = vmatpush2.msra.mxu0 0.0
  %274 = vmatprep.subr.mxu0 0.0
  %275 = vmatpush2.msra.mxu0 0.0
  %276 = vmatprep.subr.mxu0 0.0
  %277 = vmatpush2.msra.mxu0 0.0
  %278 = vmatprep.subr.mxu0 0.0
  %279 = vmatpush2.msra.mxu0 0.0
  %280 = vmatprep.subr.mxu0 0.0
  %281 = vmatpush2.msra.mxu0 0.0
  %282 = vmatprep.subr.mxu0 0.0
  %283 = vmatpush2.msra.mxu0 0.0
  %284 = vmatprep.subr.mxu0 0.0
  %285 = vmatpush2.msra.mxu0 0.0
  %286 = vmatprep.subr.mxu0 0.0
  %287 = vmatpush2.msra.mxu0 0.0
  %288 = vmatprep.subr.mxu0 0.0
  %289 = vmatpush2.msra.mxu0 0.0
  %290 = vmatprep.subr.mxu0 0.0
  %291 = vmatpush2.msra.mxu0 0.0
  %292 = vmatprep.subr.mxu0 0.0
  %293 = vmatpush2.msra.mxu0 0.0
  %294 = vmatprep.mubr.f32.mxu0 0.0
  %295 = vmatmul.mubr.f32.gmra.mxu0 %v87
  %v296 = vpop.f32.mrf.mxu0
  %v297 = vadd.f32 0.0, %v296
  %v298 = vpop.f32.mrf.mxu0
  %v299 = vadd.f32 0.0, %v298
  %300 = vmatprep.mubr.f32.mxu0 0.0
  %301 = vmatmul.mubr.f32.gmra.mxu0 %v90
  %v302 = vpop.f32.mrf.mxu0
  %v303 = vadd.f32 0.0, %v302
  %v304 = vpop.f32.mrf.mxu0
  %v305 = vadd.f32 0.0, %v304
  %306 = vmatprep.mubr.f32.mxu0 0.0
  %307 = vmatmul.mubr.f32.gmra.mxu0 %v93
  %v308 = vpop.f32.mrf.mxu0
  %v309 = vadd.f32 0.0, %v308
  %v310 = vpop.f32.mrf.mxu0
  %v311 = vadd.f32 0.0, %v310
  %312 = vmatprep.mubr.f32.mxu0 0.0
  %313 = vmatmul.mubr.f32.gmra.mxu0 %v96
  %v314 = vpop.f32.mrf.mxu0
  %v315 = vadd.f32 0.0, %v314
  %v316 = vpop.f32.mrf.mxu0
  %v317 = vadd.f32 0.0, %v316
  %318 = vmatprep.mubr.f32.mxu0 0.0
  %319 = vmatmul.mubr.f32.gmra.mxu0 %v99
  %v320 = vpop.f32.mrf.mxu0
  %v321 = vadd.f32 0.0, %v320
  %v322 = vpop.f32.mrf.mxu0
  %v323 = vadd.f32 0.0, %v322
  %324 = vmatprep.mubr.f32.mxu0 0.0
  %325 = vmatmul.mubr.f32.gmra.mxu0 %v102
  %v326 = vpop.f32.mrf.mxu0
  %v327 = vadd.f32 0.0, %v326
  %v328 = vpop.f32.mrf.mxu0
  %v329 = vadd.f32 0.0, %v328
  %330 = vmatprep.mubr.f32.mxu0 0.0
  %331 = vmatmul.mubr.f32.gmra.mxu0 %v105
  %v332 = vpop.f32.mrf.mxu0
  %v333 = vadd.f32 0.0, %v332
  %v334 = vpop.f32.mrf.mxu0
  %v335 = vadd.f32 0.0, %v334
  %336 = vmatprep.mubr.f32.mxu0 0.0
  %337 = vmatmul.mubr.f32.gmra.mxu0 %v108
  %v338 = vpop.f32.mrf.mxu0
  %v339 = vadd.f32 0.0, %v338
  %v340 = vpop.f32.mrf.mxu0
  %v341 = vadd.f32 0.0, %v340
  %342 = vmatprep.mubr.f32.mxu0 0.0
  %343 = vmatmul.mubr.f32.gmra.mxu0 %v111
  %v344 = vpop.f32.mrf.mxu0
  %v345 = vadd.f32 0.0, %v344
  %v346 = vpop.f32.mrf.mxu0
  %v347 = vadd.f32 0.0, %v346
  %348 = vmatprep.mubr.f32.mxu0 0.0
  %349 = vmatmul.mubr.f32.gmra.mxu0 %v114
  %v350 = vpop.f32.mrf.mxu0
  %v351 = vadd.f32 0.0, %v350
  %v352 = vpop.f32.mrf.mxu0
  %v353 = vadd.f32 0.0, %v352
  %354 = vmatprep.mubr.f32.mxu0 0.0
  %355 = vmatmul.mubr.f32.gmra.mxu0 %v117
  %v356 = vpop.f32.mrf.mxu0
  %v357 = vadd.f32 0.0, %v356
  %v358 = vpop.f32.mrf.mxu0
  %v359 = vadd.f32 0.0, %v358
  %360 = vmatprep.mubr.f32.mxu0 0.0
  %361 = vmatmul.mubr.f32.gmra.mxu0 %v120
  %v362 = vpop.f32.mrf.mxu0
  %v363 = vadd.f32 0.0, %v362
  %v364 = vpop.f32.mrf.mxu0
  %v365 = vadd.f32 0.0, %v364
  %366 = vmatprep.mubr.f32.mxu0 0.0
  %367 = vmatmul.mubr.f32.gmra.mxu0 %v123
  %v368 = vpop.f32.mrf.mxu0
  %v369 = vadd.f32 0.0, %v368
  %v370 = vpop.f32.mrf.mxu0
  %v371 = vadd.f32 0.0, %v370
  %372 = vmatprep.mubr.f32.mxu0 0.0
  %373 = vmatmul.mubr.f32.gmra.mxu0 %v126
  %v374 = vpop.f32.mrf.mxu0
  %v375 = vadd.f32 0.0, %v374
  %v376 = vpop.f32.mrf.mxu0
  %v377 = vadd.f32 0.0, %v376
  %378 = vmatprep.mubr.f32.mxu0 0.0
  %379 = vmatmul.mubr.f32.gmra.mxu0 %v129
  %v380 = vpop.f32.mrf.mxu0
  %v381 = vadd.f32 0.0, %v380
  %v382 = vpop.f32.mrf.mxu0
  %v383 = vadd.f32 0.0, %v382
  %384 = vmatprep.mubr.f32.mxu0 0.0
  %385 = vmatmul.mubr.f32.gmra.mxu0 %v132
  %v386 = vpop.f32.mrf.mxu0
  %v387 = vadd.f32 0.0, %v386
  %v388 = vpop.f32.mrf.mxu0
  %v389 = vadd.f32 0.0, %v388
  %390 = vmatprep.mubr.f32.mxu0 0.0
  %391 = vmatmul.mubr.f32.gmra.mxu0 %v135
  %v392 = vpop.f32.mrf.mxu0
  %v393 = vadd.f32 0.0, %v392
  %v394 = vpop.f32.mrf.mxu0
  %v395 = vadd.f32 0.0, %v394
  %396 = vmatprep.mubr.f32.mxu0 0.0
  %397 = vmatmul.mubr.f32.gmra.mxu0 %v138
  %v398 = vpop.f32.mrf.mxu0
  %v399 = vadd.f32 0.0, %v398
  %v400 = vpop.f32.mrf.mxu0
  %v401 = vadd.f32 0.0, %v400
  %402 = vmatprep.mubr.f32.mxu0 0.0
  %403 = vmatmul.mubr.f32.gmra.mxu0 %v141
  %v404 = vpop.f32.mrf.mxu0
  %v405 = vadd.f32 0.0, %v404
  %v406 = vpop.f32.mrf.mxu0
  %v407 = vadd.f32 0.0, %v406
  %408 = vmatprep.mubr.f32.mxu0 0.0
  %409 = vmatmul.mubr.f32.gmra.mxu0 %v144
  %v410 = vpop.f32.mrf.mxu0
  %v411 = vadd.f32 0.0, %v410
  %v412 = vpop.f32.mrf.mxu0
  %v413 = vadd.f32 0.0, %v412
  %414 = vmatprep.mubr.f32.mxu0 0.0
  %415 = vmatmul.mubr.f32.gmra.mxu0 %v147
  %v416 = vpop.f32.mrf.mxu0
  %v417 = vadd.f32 0.0, %v416
  %v418 = vpop.f32.mrf.mxu0
  %v419 = vadd.f32 0.0, %v418
  %420 = vmatprep.mubr.f32.mxu0 0.0
  %421 = vmatmul.mubr.f32.gmra.mxu0 %v150
  %v422 = vpop.f32.mrf.mxu0
  %v423 = vadd.f32 0.0, %v422
  %v424 = vpop.f32.mrf.mxu0
  %v425 = vadd.f32 0.0, %v424
  %426 = vmatprep.mubr.f32.mxu0 0.0
  %427 = vmatmul.mubr.f32.gmra.mxu0 %v153
  %v428 = vpop.f32.mrf.mxu0
  %v429 = vadd.f32 0.0, %v428
  %v430 = vpop.f32.mrf.mxu0
  %v431 = vadd.f32 0.0, %v430
  %432 = vmatprep.mubr.f32.mxu0 0.0
  %433 = vmatmul.mubr.f32.gmra.mxu0 %v156
  %v434 = vpop.f32.mrf.mxu0
  %v435 = vadd.f32 0.0, %v434
  %v436 = vpop.f32.mrf.mxu0
  %v437 = vadd.f32 0.0, %v436
  %438 = vmatprep.mubr.f32.mxu0 0.0
  %439 = vmatmul.mubr.f32.gmra.mxu0 %v159
  %v440 = vpop.f32.mrf.mxu0
  %v441 = vadd.f32 0.0, %v440
  %v442 = vpop.f32.mrf.mxu0
  %v443 = vadd.f32 0.0, %v442
  %444 = vmatprep.mubr.f32.mxu0 0.0
  %445 = vmatmul.mubr.f32.gmra.mxu0 %v162
  %v446 = vpop.f32.mrf.mxu0
  %v447 = vadd.f32 0.0, %v446
  %v448 = vpop.f32.mrf.mxu0
  %v449 = vadd.f32 0.0, %v448
  %450 = vmatprep.mubr.f32.mxu0 0.0
  %451 = vmatmul.mubr.f32.gmra.mxu0 %v165
  %v452 = vpop.f32.mrf.mxu0
  %v453 = vadd.f32 0.0, %v452
  %v454 = vpop.f32.mrf.mxu0
  %v455 = vadd.f32 0.0, %v454
  %456 = vmatprep.mubr.f32.mxu0 0.0
  %457 = vmatmul.mubr.f32.gmra.mxu0 %v168
  %v458 = vpop.f32.mrf.mxu0
  %v459 = vadd.f32 0.0, %v458
  %v460 = vpop.f32.mrf.mxu0
  %v461 = vadd.f32 0.0, %v460
  %462 = vmatprep.mubr.f32.mxu0 0.0
  %463 = vmatmul.mubr.f32.gmra.mxu0 %v171
  %v464 = vpop.f32.mrf.mxu0
  %v465 = vadd.f32 0.0, %v464
  %v466 = vpop.f32.mrf.mxu0
  %v467 = vadd.f32 0.0, %v466
  %468 = vmatprep.mubr.f32.mxu0 0.0
  %469 = vmatmul.mubr.f32.gmra.mxu0 %v174
  %v470 = vpop.f32.mrf.mxu0
  %v471 = vadd.f32 0.0, %v470
  %v472 = vpop.f32.mrf.mxu0
  %v473 = vadd.f32 0.0, %v472
  %474 = vmatprep.mubr.f32.mxu0 0.0
  %475 = vmatmul.mubr.f32.gmra.mxu0 %v177
  %v476 = vpop.f32.mrf.mxu0
  %v477 = vadd.f32 0.0, %v476
  %v478 = vpop.f32.mrf.mxu0
  %v479 = vadd.f32 0.0, %v478
  %480 = vmatprep.mubr.f32.mxu0 0.0
  %481 = vmatmul.mubr.f32.gmra.mxu0 %v180
  %v482 = vpop.f32.mrf.mxu0
  %v483 = vadd.f32 0.0, %v482
  %v484 = vpop.f32.mrf.mxu0
  %v485 = vadd.f32 0.0, %v484
  %486 = vmatprep.mubr.f32.mxu0 0.0
  %487 = vmatmul.mubr.f32.gmra.mxu0 %v183
  %v488 = vpop.f32.mrf.mxu0
  %v489 = vadd.f32 0.0, %v488
  %v490 = vpop.f32.mrf.mxu0
  %v491 = vadd.f32 0.0, %v490
  %492 = vmatprep.mubr.f32.mxu0 0.0
  %493 = vmatmul.mubr.f32.gmra.mxu0 %v186
  %v494 = vpop.f32.mrf.mxu0
  %v495 = vadd.f32 0.0, %v494
  %v496 = vpop.f32.mrf.mxu0
  %v497 = vadd.f32 0.0, %v496
  %498 = vmatprep.mubr.f32.mxu0 0.0
  %499 = vmatmul.mubr.f32.gmra.mxu0 %v189
  %v500 = vpop.f32.mrf.mxu0
  %v501 = vadd.f32 0.0, %v500
  %v502 = vpop.f32.mrf.mxu0
  %v503 = vadd.f32 0.0, %v502
  %504 = vmatprep.mubr.f32.mxu0 0.0
  %505 = vmatmul.mubr.f32.gmra.mxu0 %v192
  %v506 = vpop.f32.mrf.mxu0
  %v507 = vadd.f32 0.0, %v506
  %v508 = vpop.f32.mrf.mxu0
  %v509 = vadd.f32 0.0, %v508
  %510 = vmatprep.mubr.f32.mxu0 0.0
  %511 = vmatmul.mubr.f32.gmra.mxu0 %v195
  %v512 = vpop.f32.mrf.mxu0
  %v513 = vadd.f32 0.0, %v512
  %v514 = vpop.f32.mrf.mxu0
  %v515 = vadd.f32 0.0, %v514
  %516 = vmatprep.mubr.f32.mxu0 0.0
  %517 = vmatmul.mubr.f32.gmra.mxu0 %v198
  %v518 = vpop.f32.mrf.mxu0
  %v519 = vadd.f32 0.0, %v518
  %v520 = vpop.f32.mrf.mxu0
  %v521 = vadd.f32 0.0, %v520
  %522 = vmatprep.mubr.f32.mxu0 0.0
  %523 = vmatmul.mubr.f32.gmra.mxu0 %v201
  %v524 = vpop.f32.mrf.mxu0
  %v525 = vadd.f32 0.0, %v524
  %v526 = vpop.f32.mrf.mxu0
  %v527 = vadd.f32 0.0, %v526
  %528 = vmatprep.mubr.f32.mxu0 0.0
  %529 = vmatmul.mubr.f32.gmra.mxu0 %v204
  %v530 = vpop.f32.mrf.mxu0
  %v531 = vadd.f32 0.0, %v530
  %v532 = vpop.f32.mrf.mxu0
  %v533 = vadd.f32 0.0, %v532
  %534 = vmatprep.mubr.f32.mxu0 0.0
  %535 = vmatmul.mubr.f32.gmra.mxu0 %v207
  %v536 = vpop.f32.mrf.mxu0
  %v537 = vadd.f32 0.0, %v536
  %v538 = vpop.f32.mrf.mxu0
  %v539 = vadd.f32 0.0, %v538
  %540 = vmatprep.mubr.f32.mxu0 0.0
  %541 = vmatmul.mubr.f32.gmra.mxu0 %v210
  %v542 = vpop.f32.mrf.mxu0
  %v543 = vadd.f32 0.0, %v542
  %v544 = vpop.f32.mrf.mxu0
  %v545 = vadd.f32 0.0, %v544
  %546 = vmatprep.mubr.f32.mxu0 0.0
  %547 = vmatmul.mubr.f32.gmra.mxu0 %v213
  %v548 = vpop.f32.mrf.mxu0
  %v549 = vadd.f32 0.0, %v548
  %v550 = vpop.f32.mrf.mxu0
  %v551 = vadd.f32 0.0, %v550
  %552 = vmatprep.mubr.f32.mxu0 0.0
  %553 = vmatmul.mubr.f32.gmra.mxu0 %v216
  %v554 = vpop.f32.mrf.mxu0
  %v555 = vadd.f32 0.0, %v554
  %v556 = vpop.f32.mrf.mxu0
  %v557 = vadd.f32 0.0, %v556
  %558 = vmatprep.mubr.f32.mxu0 0.0
  %559 = vmatmul.mubr.f32.gmra.mxu0 %v219
  %v560 = vpop.f32.mrf.mxu0
  %v561 = vadd.f32 0.0, %v560
  %v562 = vpop.f32.mrf.mxu0
  %v563 = vadd.f32 0.0, %v562
  %564 = vmatprep.mubr.f32.mxu0 0.0
  %565 = vmatmul.mubr.f32.gmra.mxu0 %v222
  %v566 = vpop.f32.mrf.mxu0
  %v567 = vadd.f32 0.0, %v566
  %v568 = vpop.f32.mrf.mxu0
  %v569 = vadd.f32 0.0, %v568
  %570 = vmatprep.mubr.f32.mxu0 0.0
  %571 = vmatmul.mubr.f32.gmra.mxu0 %v225
  %v572 = vpop.f32.mrf.mxu0
  %v573 = vadd.f32 0.0, %v572
  %v574 = vpop.f32.mrf.mxu0
  %v575 = vadd.f32 0.0, %v574
  %576 = vmatprep.mubr.f32.mxu0 0.0
  %577 = vmatmul.mubr.f32.gmra.mxu0 %v228
  %v578 = vpop.f32.mrf.mxu0
  %v579 = vadd.f32 0.0, %v578
  %v580 = vpop.f32.mrf.mxu0
  %v581 = vadd.f32 0.0, %v580
  %582 = vdwg.mxu0
  %s583 = sld [smem:[#allocation3]]
  %s584 = ssub.f32 0.0, %s583
  %v585 = vstv %s584
  %v586 = vmax.f32 %v585, %v297
  %v587 = vmax.f32 %v585, %v299
  %v588 = vmax.f32 %v585, %v303
  %v589 = vmax.f32 %v585, %v305
  %v590 = vmax.f32 %v585, %v309
  %v591 = vmax.f32 %v585, %v311
  %v592 = vmax.f32 %v585, %v315
  %v593 = vmax.f32 %v585, %v317
  %v594 = vmax.f32 %v585, %v321
  %v595 = vmax.f32 %v585, %v323
  %v596 = vmax.f32 %v585, %v327
  %v597 = vmax.f32 %v585, %v329
  %v598 = vmax.f32 %v585, %v333
  %v599 = vmax.f32 %v585, %v335
  %v600 = vmax.f32 %v585, %v339
  %v601 = vmax.f32 %v585, %v341
  %v602 = vmax.f32 %v585, %v345
  %v603 = vmax.f32 %v585, %v347
  %v604 = vmax.f32 %v585, %v351
  %v605 = vmax.f32 %v585, %v353
  %v606 = vmax.f32 %v585, %v357
  %v607 = vmax.f32 %v585, %v359
  %v608 = vmax.f32 %v585, %v363
  %v609 = vmax.f32 %v585, %v365
  %v610 = vmax.f32 %v585, %v369
  %v611 = vmax.f32 %v585, %v371
  %v612 = vmax.f32 %v585, %v375
  %v613 = vmax.f32 %v585, %v377
  %v614 = vmax.f32 %v585, %v381
  %v615 = vmax.f32 %v585, %v383
  %v616 = vmax.f32 %v585, %v387
  %v617 = vmax.f32 %v585, %v389
  %v618 = vstv %s583
  %v619 = vmin.f32 %v618, %v586
  %v620 = vmin.f32 %v618, %v587
  %v621 = vmin.f32 %v618, %v588
  %v622 = vmin.f32 %v618, %v589
  %v623 = vmin.f32 %v618, %v590
  %v624 = vmin.f32 %v618, %v591
  %v625 = vmin.f32 %v618, %v592
  %v626 = vmin.f32 %v618, %v593
  %v627 = vmin.f32 %v618, %v594
  %v628 = vmin.f32 %v618, %v595
  %v629 = vmin.f32 %v618, %v596
  %v630 = vmin.f32 %v618, %v597
  %v631 = vmin.f32 %v618, %v598
  %v632 = vmin.f32 %v618, %v599
  %v633 = vmin.f32 %v618, %v600
  %v634 = vmin.f32 %v618, %v601
  %v635 = vmin.f32 %v618, %v602
  %v636 = vmin.f32 %v618, %v603
  %v637 = vmin.f32 %v618, %v604
  %v638 = vmin.f32 %v618, %v605
  %v639 = vmin.f32 %v618, %v606
  %v640 = vmin.f32 %v618, %v607
  %v641 = vmin.f32 %v618, %v608
  %v642 = vmin.f32 %v618, %v609
  %v643 = vmin.f32 %v618, %v610
  %v644 = vmin.f32 %v618, %v611
  %v645 = vmin.f32 %v618, %v612
  %v646 = vmin.f32 %v618, %v613
  %v647 = vmin.f32 %v618, %v614
  %v648 = vmin.f32 %v618, %v615
  %v649 = vmin.f32 %v618, %v616
  %v650 = vmin.f32 %v618, %v617
  %v651 = vsub.f32 %v297, %v619
  %v652 = vsub.f32 %v299, %v620
  %v653 = vsub.f32 %v303, %v621
  %v654 = vsub.f32 %v305, %v622
  %v655 = vsub.f32 %v309, %v623
  %v656 = vsub.f32 %v311, %v624
  %v657 = vsub.f32 %v315, %v625
  %v658 = vsub.f32 %v317, %v626
  %v659 = vsub.f32 %v321, %v627
  %v660 = vsub.f32 %v323, %v628
  %v661 = vsub.f32 %v327, %v629
  %v662 = vsub.f32 %v329, %v630
  %v663 = vsub.f32 %v333, %v631
  %v664 = vsub.f32 %v335, %v632
  %v665 = vsub.f32 %v339, %v633
  %v666 = vsub.f32 %v341, %v634
  %v667 = vsub.f32 %v345, %v635
  %v668 = vsub.f32 %v347, %v636
  %v669 = vsub.f32 %v351, %v637
  %v670 = vsub.f32 %v353, %v638
  %v671 = vsub.f32 %v357, %v639
  %v672 = vsub.f32 %v359, %v640
  %v673 = vsub.f32 %v363, %v641
  %v674 = vsub.f32 %v365, %v642
  %v675 = vsub.f32 %v369, %v643
  %v676 = vsub.f32 %v371, %v644
  %v677 = vsub.f32 %v375, %v645
  %v678 = vsub.f32 %v377, %v646
  %v679 = vsub.f32 %v381, %v647
  %v680 = vsub.f32 %v383, %v648
  %v681 = vsub.f32 %v387, %v649
  %v682 = vsub.f32 %v389, %v650
  %v683 = vld [vmem:[%s1] sm:$0xff]
  %v684 = vld [vmem:[%s1 + $0x8] sm:$0xff]
  %v685 = vld [vmem:[%s1 + $0x10] sm:$0xff]
  %v686 = vld [vmem:[%s1 + $0x18] sm:$0xff]
  %v687 = vld [vmem:[%s1 + $0x20] sm:$0xff]
  %v688 = vld [vmem:[%s1 + $0x28] sm:$0xff]
  %v689 = vld [vmem:[%s1 + $0x30] sm:$0xff]
  %v690 = vld [vmem:[%s1 + $0x38] sm:$0xff]
  %v691 = vld [vmem:[%s1 + $0x40] sm:$0xff]
  %v692 = vld [vmem:[%s1 + $0x48] sm:$0xff]
  %v693 = vld [vmem:[%s1 + $0x50] sm:$0xff]
  %v694 = vld [vmem:[%s1 + $0x58] sm:$0xff]
  %v695 = vld [vmem:[%s1 + $0x60] sm:$0xff]
  %v696 = vld [vmem:[%s1 + $0x68] sm:$0xff]
  %v697 = vld [vmem:[%s1 + $0x70] sm:$0xff]
  %v698 = vld [vmem:[%s1 + $0x78] sm:$0xff]
  %699 = vmatprep.subr.mxu0 %v682
  %700 = vmatpush1.msra.mxu0 %v681
  %701 = vmatprep.subr.mxu0 %v680
  %702 = vmatpush1.msra.mxu0 %v679
  %703 = vmatprep.subr.mxu0 %v678
  %704 = vmatpush1.msra.mxu0 %v677
  %705 = vmatprep.subr.mxu0 %v676
  %706 = vmatpush1.msra.mxu0 %v675
  %707 = vmatprep.subr.mxu0 %v674
  %708 = vmatpush1.msra.mxu0 %v673
  %709 = vmatprep.subr.mxu0 %v672
  %710 = vmatpush1.msra.mxu0 %v671
  %711 = vmatprep.subr.mxu0 %v670
  %712 = vmatpush1.msra.mxu0 %v669
  %713 = vmatprep.subr.mxu0 %v668
  %714 = vmatpush1.msra.mxu0 %v667
  %715 = vmatprep.subr.mxu0 %v666
  %716 = vmatpush1.msra.mxu0 %v665
  %717 = vmatprep.subr.mxu0 %v664
  %718 = vmatpush1.msra.mxu0 %v663
  %719 = vmatprep.subr.mxu0 %v662
  %720 = vmatpush1.msra.mxu0 %v661
  %721 = vmatprep.subr.mxu0 %v660
  %722 = vmatpush1.msra.mxu0 %v659
  %723 = vmatprep.subr.mxu0 %v658
  %724 = vmatpush1.msra.mxu0 %v657
  %725 = vmatprep.subr.mxu0 %v656
  %726 = vmatpush1.msra.mxu0 %v655
  %727 = vmatprep.subr.mxu0 %v654
  %728 = vmatpush1.msra.mxu0 %v653
  %729 = vmatprep.subr.mxu0 %v652
  %730 = vmatpush1.msra.mxu0 %v651
  %731 = vmatprep.subr.mxu0 0.0
  %732 = vmatpush2.msra.mxu0 0.0
  %733 = vmatprep.subr.mxu0 0.0
  %734 = vmatpush2.msra.mxu0 0.0
  %735 = vmatprep.subr.mxu0 0.0
  %736 = vmatpush2.msra.mxu0 0.0
  %737 = vmatprep.subr.mxu0 0.0
  %738 = vmatpush2.msra.mxu0 0.0
  %739 = vmatprep.subr.mxu0 0.0
  %740 = vmatpush2.msra.mxu0 0.0
  %741 = vmatprep.subr.mxu0 0.0
  %742 = vmatpush2.msra.mxu0 0.0
  %743 = vmatprep.subr.mxu0 0.0
  %744 = vmatpush2.msra.mxu0 0.0
  %745 = vmatprep.subr.mxu0 0.0
  %746 = vmatpush2.msra.mxu0 0.0
  %747 = vmatprep.subr.mxu0 0.0
  %748 = vmatpush2.msra.mxu0 0.0
  %749 = vmatprep.subr.mxu0 0.0
  %750 = vmatpush2.msra.mxu0 0.0
  %751 = vmatprep.subr.mxu0 0.0
  %752 = vmatpush2.msra.mxu0 0.0
  %753 = vmatprep.subr.mxu0 0.0
  %754 = vmatpush2.msra.mxu0 0.0
  %755 = vmatprep.subr.mxu0 0.0
  %756 = vmatpush2.msra.mxu0 0.0
  %757 = vmatprep.subr.mxu0 0.0
  %758 = vmatpush2.msra.mxu0 0.0
  %759 = vmatprep.subr.mxu0 0.0
  %760 = vmatpush2.msra.mxu0 0.0
  %761 = vmatprep.subr.mxu0 0.0
  %762 = vmatpush2.msra.mxu0 0.0
  %763 = vmatprep.mubr.f32.mxu0 0.0
  %764 = vmatmul.mubr.f32.gmra.mxu0 %v683
  %v765 = vpop.f32.mrf.mxu0
  %v766 = vadd.f32 %v297, %v765
  %v767 = vpop.f32.mrf.mxu0
  %v768 = vadd.f32 %v299, %v767
  %769 = vmatprep.mubr.f32.mxu0 0.0
  %770 = vmatmul.mubr.f32.gmra.mxu0 %v684
  %v771 = vpop.f32.mrf.mxu0
  %v772 = vadd.f32 %v303, %v771
  %v773 = vpop.f32.mrf.mxu0
  %v774 = vadd.f32 %v305, %v773
  %775 = vmatprep.mubr.f32.mxu0 0.0
  %776 = vmatmul.mubr.f32.gmra.mxu0 %v685
  %v777 = vpop.f32.mrf.mxu0
  %v778 = vadd.f32 %v309, %v777
  %v779 = vpop.f32.mrf.mxu0
  %v780 = vadd.f32 %v311, %v779
  %781 = vmatprep.mubr.f32.mxu0 0.0
  %782 = vmatmul.mubr.f32.gmra.mxu0 %v686
  %v783 = vpop.f32.mrf.mxu0
  %v784 = vadd.f32 %v315, %v783
  %v785 = vpop.f32.mrf.mxu0
  %v786 = vadd.f32 %v317, %v785
  %787 = vmatprep.mubr.f32.mxu0 0.0
  %788 = vmatmul.mubr.f32.gmra.mxu0 %v687
  %v789 = vpop.f32.mrf.mxu0
  %v790 = vadd.f32 %v321, %v789
  %v791 = vpop.f32.mrf.mxu0
  %v792 = vadd.f32 %v323, %v791
  %793 = vmatprep.mubr.f32.mxu0 0.0
  %794 = vmatmul.mubr.f32.gmra.mxu0 %v688
  %v795 = vpop.f32.mrf.mxu0
  %v796 = vadd.f32 %v327, %v795
  %v797 = vpop.f32.mrf.mxu0
  %v798 = vadd.f32 %v329, %v797
  %799 = vmatprep.mubr.f32.mxu0 0.0
  %800 = vmatmul.mubr.f32.gmra.mxu0 %v689
  %v801 = vpop.f32.mrf.mxu0
  %v802 = vadd.f32 %v333, %v801
  %v803 = vpop.f32.mrf.mxu0
  %v804 = vadd.f32 %v335, %v803
  %805 = vmatprep.mubr.f32.mxu0 0.0
  %806 = vmatmul.mubr.f32.gmra.mxu0 %v690
  %v807 = vpop.f32.mrf.mxu0
  %v808 = vadd.f32 %v339, %v807
  %v809 = vpop.f32.mrf.mxu0
  %v810 = vadd.f32 %v341, %v809
  %811 = vmatprep.mubr.f32.mxu0 0.0
  %812 = vmatmul.mubr.f32.gmra.mxu0 %v691
  %v813 = vpop.f32.mrf.mxu0
  %v814 = vadd.f32 %v345, %v813
  %v815 = vpop.f32.mrf.mxu0
  %v816 = vadd.f32 %v347, %v815
  %817 = vmatprep.mubr.f32.mxu0 0.0
  %818 = vmatmul.mubr.f32.gmra.mxu0 %v692
  %v819 = vpop.f32.mrf.mxu0
  %v820 = vadd.f32 %v351, %v819
  %v821 = vpop.f32.mrf.mxu0
  %v822 = vadd.f32 %v353, %v821
  %823 = vmatprep.mubr.f32.mxu0 0.0
  %824 = vmatmul.mubr.f32.gmra.mxu0 %v693
  %v825 = vpop.f32.mrf.mxu0
  %v826 = vadd.f32 %v357, %v825
  %v827 = vpop.f32.mrf.mxu0
  %v828 = vadd.f32 %v359, %v827
  %829 = vmatprep.mubr.f32.mxu0 0.0
  %830 = vmatmul.mubr.f32.gmra.mxu0 %v694
  %v831 = vpop.f32.mrf.mxu0
  %v832 = vadd.f32 %v363, %v831
  %v833 = vpop.f32.mrf.mxu0
  %v834 = vadd.f32 %v365, %v833
  %835 = vmatprep.mubr.f32.mxu0 0.0
  %836 = vmatmul.mubr.f32.gmra.mxu0 %v695
  %v837 = vpop.f32.mrf.mxu0
  %v838 = vadd.f32 %v369, %v837
  %v839 = vpop.f32.mrf.mxu0
  %v840 = vadd.f32 %v371, %v839
  %841 = vmatprep.mubr.f32.mxu0 0.0
  %842 = vmatmul.mubr.f32.gmra.mxu0 %v696
  %v843 = vpop.f32.mrf.mxu0
  %v844 = vadd.f32 %v375, %v843
  %v845 = vpop.f32.mrf.mxu0
  %v846 = vadd.f32 %v377, %v845
  %847 = vmatprep.mubr.f32.mxu0 0.0
  %848 = vmatmul.mubr.f32.gmra.mxu0 %v697
  %v849 = vpop.f32.mrf.mxu0
  %v850 = vadd.f32 %v381, %v849
  %v851 = vpop.f32.mrf.mxu0
  %v852 = vadd.f32 %v383, %v851
  %853 = vmatprep.mubr.f32.mxu0 0.0
  %854 = vmatmul.mubr.f32.gmra.mxu0 %v698
  %v855 = vpop.f32.mrf.mxu0
  %v856 = vadd.f32 %v387, %v855
  %v857 = vpop.f32.mrf.mxu0
  %v858 = vadd.f32 %v389, %v857
  %859 = vdwg.mxu0
  %v860 = vmax.f32 %v585, %v766
  %v861 = vmax.f32 %v585, %v768
  %v862 = vmax.f32 %v585, %v772
  %v863 = vmax.f32 %v585, %v774
  %v864 = vmax.f32 %v585, %v778
  %v865 = vmax.f32 %v585, %v780
  %v866 = vmax.f32 %v585, %v784
  %v867 = vmax.f32 %v585, %v786
  %v868 = vmax.f32 %v585, %v790
  %v869 = vmax.f32 %v585, %v792
  %v870 = vmax.f32 %v585, %v796
  %v871 = vmax.f32 %v585, %v798
  %v872 = vmax.f32 %v585, %v802
  %v873 = vmax.f32 %v585, %v804
  %v874 = vmax.f32 %v585, %v808
  %v875 = vmax.f32 %v585, %v810
  %v876 = vmax.f32 %v585, %v814
  %v877 = vmax.f32 %v585, %v816
  %v878 = vmax.f32 %v585, %v820
  %v879 = vmax.f32 %v585, %v822
  %v880 = vmax.f32 %v585, %v826
  %v881 = vmax.f32 %v585, %v828
  %v882 = vmax.f32 %v585, %v832
  %v883 = vmax.f32 %v585, %v834
  %v884 = vmax.f32 %v585, %v838
  %v885 = vmax.f32 %v585, %v840
  %v886 = vmax.f32 %v585, %v844
  %v887 = vmax.f32 %v585, %v846
  %v888 = vmax.f32 %v585, %v850
  %v889 = vmax.f32 %v585, %v852
  %v890 = vmax.f32 %v585, %v856
  %v891 = vmax.f32 %v585, %v858
  %v892 = vmin.f32 %v618, %v860
  %v893 = vmin.f32 %v618, %v861
  %v894 = vmin.f32 %v618, %v862
  %v895 = vmin.f32 %v618, %v863
  %v896 = vmin.f32 %v618, %v864
  %v897 = vmin.f32 %v618, %v865
  %v898 = vmin.f32 %v618, %v866
  %v899 = vmin.f32 %v618, %v867
  %v900 = vmin.f32 %v618, %v868
  %v901 = vmin.f32 %v618, %v869
  %v902 = vmin.f32 %v618, %v870
  %v903 = vmin.f32 %v618, %v871
  %v904 = vmin.f32 %v618, %v872
  %v905 = vmin.f32 %v618, %v873
  %v906 = vmin.f32 %v618, %v874
  %v907 = vmin.f32 %v618, %v875
  %v908 = vmin.f32 %v618, %v876
  %v909 = vmin.f32 %v618, %v877
  %v910 = vmin.f32 %v618, %v878
  %v911 = vmin.f32 %v618, %v879
  %v912 = vmin.f32 %v618, %v880
  %v913 = vmin.f32 %v618, %v881
  %v914 = vmin.f32 %v618, %v882
  %v915 = vmin.f32 %v618, %v883
  %v916 = vmin.f32 %v618, %v884
  %v917 = vmin.f32 %v618, %v885
  %v918 = vmin.f32 %v618, %v886
  %v919 = vmin.f32 %v618, %v887
  %v920 = vmin.f32 %v618, %v888
  %v921 = vmin.f32 %v618, %v889
  %v922 = vmin.f32 %v618, %v890
  %v923 = vmin.f32 %v618, %v891
  %v924 = vsub.f32 %v766, %v892
  %v925 = vsub.f32 %v768, %v893
  %v926 = vsub.f32 %v772, %v894
  %v927 = vsub.f32 %v774, %v895
  %v928 = vsub.f32 %v778, %v896
  %v929 = vsub.f32 %v780, %v897
  %v930 = vsub.f32 %v784, %v898
  %v931 = vsub.f32 %v786, %v899
  %v932 = vsub.f32 %v790, %v900
  %v933 = vsub.f32 %v792, %v901
  %v934 = vsub.f32 %v796, %v902
  %v935 = vsub.f32 %v798, %v903
  %v936 = vsub.f32 %v802, %v904
  %v937 = vsub.f32 %v804, %v905
  %v938 = vsub.f32 %v808, %v906
  %v939 = vsub.f32 %v810, %v907
  %v940 = vsub.f32 %v814, %v908
  %v941 = vsub.f32 %v816, %v909
  %v942 = vsub.f32 %v820, %v910
  %v943 = vsub.f32 %v822, %v911
  %v944 = vsub.f32 %v826, %v912
  %v945 = vsub.f32 %v828, %v913
  %v946 = vsub.f32 %v832, %v914
  %v947 = vsub.f32 %v834, %v915
  %v948 = vsub.f32 %v838, %v916
  %v949 = vsub.f32 %v840, %v917
  %v950 = vsub.f32 %v844, %v918
  %v951 = vsub.f32 %v846, %v919
  %v952 = vsub.f32 %v850, %v920
  %v953 = vsub.f32 %v852, %v921
  %v954 = vsub.f32 %v856, %v922
  %v955 = vsub.f32 %v858, %v923
  %s956 = scalar_lea.vmem %s1, 128
  %v957 = vld [vmem:[%s956] sm:$0xff]
  %v958 = vld [vmem:[%s956 + $0x8] sm:$0xff]
  %v959 = vld [vmem:[%s956 + $0x10] sm:$0xff]
  %v960 = vld [vmem:[%s956 + $0x18] sm:$0xff]
  %v961 = vld [vmem:[%s956 + $0x20] sm:$0xff]
  %v962 = vld [vmem:[%s956 + $0x28] sm:$0xff]
  %v963 = vld [vmem:[%s956 + $0x30] sm:$0xff]
  %v964 = vld [vmem:[%s956 + $0x38] sm:$0xff]
  %v965 = vld [vmem:[%s956 + $0x40] sm:$0xff]
  %v966 = vld [vmem:[%s956 + $0x48] sm:$0xff]
  %v967 = vld [vmem:[%s956 + $0x50] sm:$0xff]
  %v968 = vld [vmem:[%s956 + $0x58] sm:$0xff]
  %v969 = vld [vmem:[%s956 + $0x60] sm:$0xff]
  %v970 = vld [vmem:[%s956 + $0x68] sm:$0xff]
  %v971 = vld [vmem:[%s956 + $0x70] sm:$0xff]
  %v972 = vld [vmem:[%s956 + $0x78] sm:$0xff]
  %973 = vmatprep.subr.mxu0 %v955
  %974 = vmatpush1.msra.mxu0 %v954
  %975 = vmatprep.subr.mxu0 %v953
  %976 = vmatpush1.msra.mxu0 %v952
  %977 = vmatprep.subr.mxu0 %v951
  %978 = vmatpush1.msra.mxu0 %v950
  %979 = vmatprep.subr.mxu0 %v949
  %980 = vmatpush1.msra.mxu0 %v948
  %981 = vmatprep.subr.mxu0 %v947
  %982 = vmatpush1.msra.mxu0 %v946
  %983 = vmatprep.subr.mxu0 %v945
  %984 = vmatpush1.msra.mxu0 %v944
  %985 = vmatprep.subr.mxu0 %v943
  %986 = vmatpush1.msra.mxu0 %v942
  %987 = vmatprep.subr.mxu0 %v941
  %988 = vmatpush1.msra.mxu0 %v940
  %989 = vmatprep.subr.mxu0 %v939
  %990 = vmatpush1.msra.mxu0 %v938
  %991 = vmatprep.subr.mxu0 %v937
  %992 = vmatpush1.msra.mxu0 %v936
  %993 = vmatprep.subr.mxu0 %v935
  %994 = vmatpush1.msra.mxu0 %v934
  %995 = vmatprep.subr.mxu0 %v933
  %996 = vmatpush1.msra.mxu0 %v932
  %997 = vmatprep.subr.mxu0 %v931
  %998 = vmatpush1.msra.mxu0 %v930
  %999 = vmatprep.subr.mxu0 %v929
  %1000 = vmatpush1.msra.mxu0 %v928
  %1001 = vmatprep.subr.mxu0 %v927
  %1002 = vmatpush1.msra.mxu0 %v926
  %1003 = vmatprep.subr.mxu0 %v925
  %1004 = vmatpush1.msra.mxu0 %v924
  %1005 = vmatprep.subr.mxu0 0.0
  %1006 = vmatpush2.msra.mxu0 0.0
  %1007 = vmatprep.subr.mxu0 0.0
  %1008 = vmatpush2.msra.mxu0 0.0
  %1009 = vmatprep.subr.mxu0 0.0
  %1010 = vmatpush2.msra.mxu0 0.0
  %1011 = vmatprep.subr.mxu0 0.0
  %1012 = vmatpush2.msra.mxu0 0.0
  %1013 = vmatprep.subr.mxu0 0.0
  %1014 = vmatpush2.msra.mxu0 0.0
  %1015 = vmatprep.subr.mxu0 0.0
  %1016 = vmatpush2.msra.mxu0 0.0
  %1017 = vmatprep.subr.mxu0 0.0
  %1018 = vmatpush2.msra.mxu0 0.0
  %1019 = vmatprep.subr.mxu0 0.0
  %1020 = vmatpush2.msra.mxu0 0.0
  %1021 = vmatprep.subr.mxu0 0.0
  %1022 = vmatpush2.msra.mxu0 0.0
  %1023 = vmatprep.subr.mxu0 0.0
  %1024 = vmatpush2.msra.mxu0 0.0
  %1025 = vmatprep.subr.mxu0 0.0
  %1026 = vmatpush2.msra.mxu0 0.0
  %1027 = vmatprep.subr.mxu0 0.0
  %1028 = vmatpush2.msra.mxu0 0.0
  %1029 = vmatprep.subr.mxu0 0.0
  %1030 = vmatpush2.msra.mxu0 0.0
  %1031 = vmatprep.subr.mxu0 0.0
  %1032 = vmatpush2.msra.mxu0 0.0
  %1033 = vmatprep.subr.mxu0 0.0
  %1034 = vmatpush2.msra.mxu0 0.0
  %1035 = vmatprep.subr.mxu0 0.0
  %1036 = vmatpush2.msra.mxu0 0.0
  %1037 = vmatprep.mubr.f32.mxu0 0.0
  %1038 = vmatmul.mubr.f32.gmra.mxu0 %v957
  %v1039 = vpop.f32.mrf.mxu0
  %v1040 = vadd.f32 %v393, %v1039
  %v1041 = vpop.f32.mrf.mxu0
  %v1042 = vadd.f32 %v395, %v1041
  %1043 = vmatprep.mubr.f32.mxu0 0.0
  %1044 = vmatmul.mubr.f32.gmra.mxu0 %v958
  %v1045 = vpop.f32.mrf.mxu0
  %v1046 = vadd.f32 %v399, %v1045
  %v1047 = vpop.f32.mrf.mxu0
  %v1048 = vadd.f32 %v401, %v1047
  %1049 = vmatprep.mubr.f32.mxu0 0.0
  %1050 = vmatmul.mubr.f32.gmra.mxu0 %v959
  %v1051 = vpop.f32.mrf.mxu0
  %v1052 = vadd.f32 %v405, %v1051
  %v1053 = vpop.f32.mrf.mxu0
  %v1054 = vadd.f32 %v407, %v1053
  %1055 = vmatprep.mubr.f32.mxu0 0.0
  %1056 = vmatmul.mubr.f32.gmra.mxu0 %v960
  %v1057 = vpop.f32.mrf.mxu0
  %v1058 = vadd.f32 %v411, %v1057
  %v1059 = vpop.f32.mrf.mxu0
  %v1060 = vadd.f32 %v413, %v1059
  %1061 = vmatprep.mubr.f32.mxu0 0.0
  %1062 = vmatmul.mubr.f32.gmra.mxu0 %v961
  %v1063 = vpop.f32.mrf.mxu0
  %v1064 = vadd.f32 %v417, %v1063
  %v1065 = vpop.f32.mrf.mxu0
  %v1066 = vadd.f32 %v419, %v1065
  %1067 = vmatprep.mubr.f32.mxu0 0.0
  %1068 = vmatmul.mubr.f32.gmra.mxu0 %v962
  %v1069 = vpop.f32.mrf.mxu0
  %v1070 = vadd.f32 %v423, %v1069
  %v1071 = vpop.f32.mrf.mxu0
  %v1072 = vadd.f32 %v425, %v1071
  %1073 = vmatprep.mubr.f32.mxu0 0.0
  %1074 = vmatmul.mubr.f32.gmra.mxu0 %v963
  %v1075 = vpop.f32.mrf.mxu0
  %v1076 = vadd.f32 %v429, %v1075
  %v1077 = vpop.f32.mrf.mxu0
  %v1078 = vadd.f32 %v431, %v1077
  %1079 = vmatprep.mubr.f32.mxu0 0.0
  %1080 = vmatmul.mubr.f32.gmra.mxu0 %v964
  %v1081 = vpop.f32.mrf.mxu0
  %v1082 = vadd.f32 %v435, %v1081
  %v1083 = vpop.f32.mrf.mxu0
  %v1084 = vadd.f32 %v437, %v1083
  %1085 = vmatprep.mubr.f32.mxu0 0.0
  %1086 = vmatmul.mubr.f32.gmra.mxu0 %v965
  %v1087 = vpop.f32.mrf.mxu0
  %v1088 = vadd.f32 %v441, %v1087
  %v1089 = vpop.f32.mrf.mxu0
  %v1090 = vadd.f32 %v443, %v1089
  %1091 = vmatprep.mubr.f32.mxu0 0.0
  %1092 = vmatmul.mubr.f32.gmra.mxu0 %v966
  %v1093 = vpop.f32.mrf.mxu0
  %v1094 = vadd.f32 %v447, %v1093
  %v1095 = vpop.f32.mrf.mxu0
  %v1096 = vadd.f32 %v449, %v1095
  %1097 = vmatprep.mubr.f32.mxu0 0.0
  %1098 = vmatmul.mubr.f32.gmra.mxu0 %v967
  %v1099 = vpop.f32.mrf.mxu0
  %v1100 = vadd.f32 %v453, %v1099
  %v1101 = vpop.f32.mrf.mxu0
  %v1102 = vadd.f32 %v455, %v1101
  %1103 = vmatprep.mubr.f32.mxu0 0.0
  %1104 = vmatmul.mubr.f32.gmra.mxu0 %v968
  %v1105 = vpop.f32.mrf.mxu0
  %v1106 = vadd.f32 %v459, %v1105
  %v1107 = vpop.f32.mrf.mxu0
  %v1108 = vadd.f32 %v461, %v1107
  %1109 = vmatprep.mubr.f32.mxu0 0.0
  %1110 = vmatmul.mubr.f32.gmra.mxu0 %v969
  %v1111 = vpop.f32.mrf.mxu0
  %v1112 = vadd.f32 %v465, %v1111
  %v1113 = vpop.f32.mrf.mxu0
  %v1114 = vadd.f32 %v467, %v1113
  %1115 = vmatprep.mubr.f32.mxu0 0.0
  %1116 = vmatmul.mubr.f32.gmra.mxu0 %v970
  %v1117 = vpop.f32.mrf.mxu0
  %v1118 = vadd.f32 %v471, %v1117
  %v1119 = vpop.f32.mrf.mxu0
  %v1120 = vadd.f32 %v473, %v1119
  %1121 = vmatprep.mubr.f32.mxu0 0.0
  %1122 = vmatmul.mubr.f32.gmra.mxu0 %v971
  %v1123 = vpop.f32.mrf.mxu0
  %v1124 = vadd.f32 %v477, %v1123
  %v1125 = vpop.f32.mrf.mxu0
  %v1126 = vadd.f32 %v479, %v1125
  %1127 = vmatprep.mubr.f32.mxu0 0.0
  %1128 = vmatmul.mubr.f32.gmra.mxu0 %v972
  %v1129 = vpop.f32.mrf.mxu0
  %v1130 = vadd.f32 %v483, %v1129
  %v1131 = vpop.f32.mrf.mxu0
  %v1132 = vadd.f32 %v485, %v1131
  %1133 = vdwg.mxu0
  %s1134 = sld [smem:[#allocation3 + $0x1]]
  %s1135 = ssub.f32 0.0, %s1134
  %v1136 = vstv %s1135
  %v1137 = vmax.f32 %v1136, %v1040
  %v1138 = vmax.f32 %v1136, %v1042
  %v1139 = vmax.f32 %v1136, %v1046
  %v1140 = vmax.f32 %v1136, %v1048
  %v1141 = vmax.f32 %v1136, %v1052
  %v1142 = vmax.f32 %v1136, %v1054
  %v1143 = vmax.f32 %v1136, %v1058
  %v1144 = vmax.f32 %v1136, %v1060
  %v1145 = vmax.f32 %v1136, %v1064
  %v1146 = vmax.f32 %v1136, %v1066
  %v1147 = vmax.f32 %v1136, %v1070
  %v1148 = vmax.f32 %v1136, %v1072
  %v1149 = vmax.f32 %v1136, %v1076
  %v1150 = vmax.f32 %v1136, %v1078
  %v1151 = vmax.f32 %v1136, %v1082
  %v1152 = vmax.f32 %v1136, %v1084
  %v1153 = vmax.f32 %v1136, %v1088
  %v1154 = vmax.f32 %v1136, %v1090
  %v1155 = vmax.f32 %v1136, %v1094
  %v1156 = vmax.f32 %v1136, %v1096
  %v1157 = vmax.f32 %v1136, %v1100
  %v1158 = vmax.f32 %v1136, %v1102
  %v1159 = vmax.f32 %v1136, %v1106
  %v1160 = vmax.f32 %v1136, %v1108
  %v1161 = vmax.f32 %v1136, %v1112
  %v1162 = vmax.f32 %v1136, %v1114
  %v1163 = vmax.f32 %v1136, %v1118
  %v1164 = vmax.f32 %v1136, %v1120
  %v1165 = vmax.f32 %v1136, %v1124
  %v1166 = vmax.f32 %v1136, %v1126
  %v1167 = vmax.f32 %v1136, %v1130
  %v1168 = vmax.f32 %v1136, %v1132
  %v1169 = vstv %s1134
  %v1170 = vmin.f32 %v1169, %v1137
  %v1171 = vmin.f32 %v1169, %v1138
  %v1172 = vmin.f32 %v1169, %v1139
  %v1173 = vmin.f32 %v1169, %v1140
  %v1174 = vmin.f32 %v1169, %v1141
  %v1175 = vmin.f32 %v1169, %v1142
  %v1176 = vmin.f32 %v1169, %v1143
  %v1177 = vmin.f32 %v1169, %v1144
  %v1178 = vmin.f32 %v1169, %v1145
  %v1179 = vmin.f32 %v1169, %v1146
  %v1180 = vmin.f32 %v1169, %v1147
  %v1181 = vmin.f32 %v1169, %v1148
  %v1182 = vmin.f32 %v1169, %v1149
  %v1183 = vmin.f32 %v1169, %v1150
  %v1184 = vmin.f32 %v1169, %v1151
  %v1185 = vmin.f32 %v1169, %v1152
  %v1186 = vmin.f32 %v1169, %v1153
  %v1187 = vmin.f32 %v1169, %v1154
  %v1188 = vmin.f32 %v1169, %v1155
  %v1189 = vmin.f32 %v1169, %v1156
  %v1190 = vmin.f32 %v1169, %v1157
  %v1191 = vmin.f32 %v1169, %v1158
  %v1192 = vmin.f32 %v1169, %v1159
  %v1193 = vmin.f32 %v1169, %v1160
  %v1194 = vmin.f32 %v1169, %v1161
  %v1195 = vmin.f32 %v1169, %v1162
  %v1196 = vmin.f32 %v1169, %v1163
  %v1197 = vmin.f32 %v1169, %v1164
  %v1198 = vmin.f32 %v1169, %v1165
  %v1199 = vmin.f32 %v1169, %v1166
  %v1200 = vmin.f32 %v1169, %v1167
  %v1201 = vmin.f32 %v1169, %v1168
  %v1202 = vsub.f32 %v1040, %v1170
  %v1203 = vsub.f32 %v1042, %v1171
  %v1204 = vsub.f32 %v1046, %v1172
  %v1205 = vsub.f32 %v1048, %v1173
  %v1206 = vsub.f32 %v1052, %v1174
  %v1207 = vsub.f32 %v1054, %v1175
  %v1208 = vsub.f32 %v1058, %v1176
  %v1209 = vsub.f32 %v1060, %v1177
  %v1210 = vsub.f32 %v1064, %v1178
  %v1211 = vsub.f32 %v1066, %v1179
  %v1212 = vsub.f32 %v1070, %v1180
  %v1213 = vsub.f32 %v1072, %v1181
  %v1214 = vsub.f32 %v1076, %v1182
  %v1215 = vsub.f32 %v1078, %v1183
  %v1216 = vsub.f32 %v1082, %v1184
  %v1217 = vsub.f32 %v1084, %v1185
  %v1218 = vsub.f32 %v1088, %v1186
  %v1219 = vsub.f32 %v1090, %v1187
  %v1220 = vsub.f32 %v1094, %v1188
  %v1221 = vsub.f32 %v1096, %v1189
  %v1222 = vsub.f32 %v1100, %v1190
  %v1223 = vsub.f32 %v1102, %v1191
  %v1224 = vsub.f32 %v1106, %v1192
  %v1225 = vsub.f32 %v1108, %v1193
  %v1226 = vsub.f32 %v1112, %v1194
  %v1227 = vsub.f32 %v1114, %v1195
  %v1228 = vsub.f32 %v1118, %v1196
  %v1229 = vsub.f32 %v1120, %v1197
  %v1230 = vsub.f32 %v1124, %v1198
  %v1231 = vsub.f32 %v1126, %v1199
  %v1232 = vsub.f32 %v1130, %v1200
  %v1233 = vsub.f32 %v1132, %v1201
  %s1234 = scalar_lea.vmem %s1, 256
  %v1235 = vld [vmem:[%s1234] sm:$0xff]
  %v1236 = vld [vmem:[%s1234 + $0x8] sm:$0xff]
  %v1237 = vld [vmem:[%s1234 + $0x10] sm:$0xff]
  %v1238 = vld [vmem:[%s1234 + $0x18] sm:$0xff]
  %v1239 = vld [vmem:[%s1234 + $0x20] sm:$0xff]
  %v1240 = vld [vmem:[%s1234 + $0x28] sm:$0xff]
  %v1241 = vld [vmem:[%s1234 + $0x30] sm:$0xff]
  %v1242 = vld [vmem:[%s1234 + $0x38] sm:$0xff]
  %v1243 = vld [vmem:[%s1234 + $0x40] sm:$0xff]
  %v1244 = vld [vmem:[%s1234 + $0x48] sm:$0xff]
  %v1245 = vld [vmem:[%s1234 + $0x50] sm:$0xff]
  %v1246 = vld [vmem:[%s1234 + $0x58] sm:$0xff]
  %v1247 = vld [vmem:[%s1234 + $0x60] sm:$0xff]
  %v1248 = vld [vmem:[%s1234 + $0x68] sm:$0xff]
  %v1249 = vld [vmem:[%s1234 + $0x70] sm:$0xff]
  %v1250 = vld [vmem:[%s1234 + $0x78] sm:$0xff]
  %1251 = vmatprep.subr.mxu0 %v1233
  %1252 = vmatpush1.msra.mxu0 %v1232
  %1253 = vmatprep.subr.mxu0 %v1231
  %1254 = vmatpush1.msra.mxu0 %v1230
  %1255 = vmatprep.subr.mxu0 %v1229
  %1256 = vmatpush1.msra.mxu0 %v1228
  %1257 = vmatprep.subr.mxu0 %v1227
  %1258 = vmatpush1.msra.mxu0 %v1226
  %1259 = vmatprep.subr.mxu0 %v1225
  %1260 = vmatpush1.msra.mxu0 %v1224
  %1261 = vmatprep.subr.mxu0 %v1223
  %1262 = vmatpush1.msra.mxu0 %v1222
  %1263 = vmatprep.subr.mxu0 %v1221
  %1264 = vmatpush1.msra.mxu0 %v1220
  %1265 = vmatprep.subr.mxu0 %v1219
  %1266 = vmatpush1.msra.mxu0 %v1218
  %1267 = vmatprep.subr.mxu0 %v1217
  %1268 = vmatpush1.msra.mxu0 %v1216
  %1269 = vmatprep.subr.mxu0 %v1215
  %1270 = vmatpush1.msra.mxu0 %v1214
  %1271 = vmatprep.subr.mxu0 %v1213
  %1272 = vmatpush1.msra.mxu0 %v1212
  %1273 = vmatprep.subr.mxu0 %v1211
  %1274 = vmatpush1.msra.mxu0 %v1210
  %1275 = vmatprep.subr.mxu0 %v1209
  %1276 = vmatpush1.msra.mxu0 %v1208
  %1277 = vmatprep.subr.mxu0 %v1207
  %1278 = vmatpush1.msra.mxu0 %v1206
  %1279 = vmatprep.subr.mxu0 %v1205
  %1280 = vmatpush1.msra.mxu0 %v1204
  %1281 = vmatprep.subr.mxu0 %v1203
  %1282 = vmatpush1.msra.mxu0 %v1202
  %1283 = vmatprep.subr.mxu0 0.0
  %1284 = vmatpush2.msra.mxu0 0.0
  %1285 = vmatprep.subr.mxu0 0.0
  %1286 = vmatpush2.msra.mxu0 0.0
  %1287 = vmatprep.subr.mxu0 0.0
  %1288 = vmatpush2.msra.mxu0 0.0
  %1289 = vmatprep.subr.mxu0 0.0
  %1290 = vmatpush2.msra.mxu0 0.0
  %1291 = vmatprep.subr.mxu0 0.0
  %1292 = vmatpush2.msra.mxu0 0.0
  %1293 = vmatprep.subr.mxu0 0.0
  %1294 = vmatpush2.msra.mxu0 0.0
  %1295 = vmatprep.subr.mxu0 0.0
  %1296 = vmatpush2.msra.mxu0 0.0
  %1297 = vmatprep.subr.mxu0 0.0
  %1298 = vmatpush2.msra.mxu0 0.0
  %1299 = vmatprep.subr.mxu0 0.0
  %1300 = vmatpush2.msra.mxu0 0.0
  %1301 = vmatprep.subr.mxu0 0.0
  %1302 = vmatpush2.msra.mxu0 0.0
  %1303 = vmatprep.subr.mxu0 0.0
  %1304 = vmatpush2.msra.mxu0 0.0
  %1305 = vmatprep.subr.mxu0 0.0
  %1306 = vmatpush2.msra.mxu0 0.0
  %1307 = vmatprep.subr.mxu0 0.0
  %1308 = vmatpush2.msra.mxu0 0.0
  %1309 = vmatprep.subr.mxu0 0.0
  %1310 = vmatpush2.msra.mxu0 0.0
  %1311 = vmatprep.subr.mxu0 0.0
  %1312 = vmatpush2.msra.mxu0 0.0
  %1313 = vmatprep.subr.mxu0 0.0
  %1314 = vmatpush2.msra.mxu0 0.0
  %1315 = vmatprep.mubr.f32.mxu0 0.0
  %1316 = vmatmul.mubr.f32.gmra.mxu0 %v1235
  %v1317 = vpop.f32.mrf.mxu0
  %v1318 = vadd.f32 %v489, %v1317
  %v1319 = vpop.f32.mrf.mxu0
  %v1320 = vadd.f32 %v491, %v1319
  %1321 = vmatprep.mubr.f32.mxu0 0.0
  %1322 = vmatmul.mubr.f32.gmra.mxu0 %v1236
  %v1323 = vpop.f32.mrf.mxu0
  %v1324 = vadd.f32 %v495, %v1323
  %v1325 = vpop.f32.mrf.mxu0
  %v1326 = vadd.f32 %v497, %v1325
  %1327 = vmatprep.mubr.f32.mxu0 0.0
  %1328 = vmatmul.mubr.f32.gmra.mxu0 %v1237
  %v1329 = vpop.f32.mrf.mxu0
  %v1330 = vadd.f32 %v501, %v1329
  %v1331 = vpop.f32.mrf.mxu0
  %v1332 = vadd.f32 %v503, %v1331
  %1333 = vmatprep.mubr.f32.mxu0 0.0
  %1334 = vmatmul.mubr.f32.gmra.mxu0 %v1238
  %v1335 = vpop.f32.mrf.mxu0
  %v1336 = vadd.f32 %v507, %v1335
  %v1337 = vpop.f32.mrf.mxu0
  %v1338 = vadd.f32 %v509, %v1337
  %1339 = vmatprep.mubr.f32.mxu0 0.0
  %1340 = vmatmul.mubr.f32.gmra.mxu0 %v1239
  %v1341 = vpop.f32.mrf.mxu0
  %v1342 = vadd.f32 %v513, %v1341
  %v1343 = vpop.f32.mrf.mxu0
  %v1344 = vadd.f32 %v515, %v1343
  %1345 = vmatprep.mubr.f32.mxu0 0.0
  %1346 = vmatmul.mubr.f32.gmra.mxu0 %v1240
  %v1347 = vpop.f32.mrf.mxu0
  %v1348 = vadd.f32 %v519, %v1347
  %v1349 = vpop.f32.mrf.mxu0
  %v1350 = vadd.f32 %v521, %v1349
  %1351 = vmatprep.mubr.f32.mxu0 0.0
  %1352 = vmatmul.mubr.f32.gmra.mxu0 %v1241
  %v1353 = vpop.f32.mrf.mxu0
  %v1354 = vadd.f32 %v525, %v1353
  %v1355 = vpop.f32.mrf.mxu0
  %v1356 = vadd.f32 %v527, %v1355
  %1357 = vmatprep.mubr.f32.mxu0 0.0
  %1358 = vmatmul.mubr.f32.gmra.mxu0 %v1242
  %v1359 = vpop.f32.mrf.mxu0
  %v1360 = vadd.f32 %v531, %v1359
  %v1361 = vpop.f32.mrf.mxu0
  %v1362 = vadd.f32 %v533, %v1361
  %1363 = vmatprep.mubr.f32.mxu0 0.0
  %1364 = vmatmul.mubr.f32.gmra.mxu0 %v1243
  %v1365 = vpop.f32.mrf.mxu0
  %v1366 = vadd.f32 %v537, %v1365
  %v1367 = vpop.f32.mrf.mxu0
  %v1368 = vadd.f32 %v539, %v1367
  %1369 = vmatprep.mubr.f32.mxu0 0.0
  %1370 = vmatmul.mubr.f32.gmra.mxu0 %v1244
  %v1371 = vpop.f32.mrf.mxu0
  %v1372 = vadd.f32 %v543, %v1371
  %v1373 = vpop.f32.mrf.mxu0
  %v1374 = vadd.f32 %v545, %v1373
  %1375 = vmatprep.mubr.f32.mxu0 0.0
  %1376 = vmatmul.mubr.f32.gmra.mxu0 %v1245
  %v1377 = vpop.f32.mrf.mxu0
  %v1378 = vadd.f32 %v549, %v1377
  %v1379 = vpop.f32.mrf.mxu0
  %v1380 = vadd.f32 %v551, %v1379
  %1381 = vmatprep.mubr.f32.mxu0 0.0
  %1382 = vmatmul.mubr.f32.gmra.mxu0 %v1246
  %v1383 = vpop.f32.mrf.mxu0
  %v1384 = vadd.f32 %v555, %v1383
  %v1385 = vpop.f32.mrf.mxu0
  %v1386 = vadd.f32 %v557, %v1385
  %1387 = vmatprep.mubr.f32.mxu0 0.0
  %1388 = vmatmul.mubr.f32.gmra.mxu0 %v1247
  %v1389 = vpop.f32.mrf.mxu0
  %v1390 = vadd.f32 %v561, %v1389
  %v1391 = vpop.f32.mrf.mxu0
  %v1392 = vadd.f32 %v563, %v1391
  %1393 = vmatprep.mubr.f32.mxu0 0.0
  %1394 = vmatmul.mubr.f32.gmra.mxu0 %v1248
  %v1395 = vpop.f32.mrf.mxu0
  %v1396 = vadd.f32 %v567, %v1395
  %v1397 = vpop.f32.mrf.mxu0
  %v1398 = vadd.f32 %v569, %v1397
  %1399 = vmatprep.mubr.f32.mxu0 0.0
  %1400 = vmatmul.mubr.f32.gmra.mxu0 %v1249
  %v1401 = vpop.f32.mrf.mxu0
  %v1402 = vadd.f32 %v573, %v1401
  %v1403 = vpop.f32.mrf.mxu0
  %v1404 = vadd.f32 %v575, %v1403
  %1405 = vmatprep.mubr.f32.mxu0 0.0
  %1406 = vmatmul.mubr.f32.gmra.mxu0 %v1250
  %v1407 = vpop.f32.mrf.mxu0
  %v1408 = vadd.f32 %v579, %v1407
  %v1409 = vpop.f32.mrf.mxu0
  %v1410 = vadd.f32 %v581, %v1409
  %1411 = vdwg.mxu0
  %s1412 = sld [smem:[#allocation3 + $0x2]]
  %s1413 = ssub.f32 0.0, %s1412
  %v1414 = vstv %s1413
  %v1415 = vmax.f32 %v1414, %v1318
  %v1416 = vmax.f32 %v1414, %v1320
  %v1417 = vmax.f32 %v1414, %v1324
  %v1418 = vmax.f32 %v1414, %v1326
  %v1419 = vmax.f32 %v1414, %v1330
  %v1420 = vmax.f32 %v1414, %v1332
  %v1421 = vmax.f32 %v1414, %v1336
  %v1422 = vmax.f32 %v1414, %v1338
  %v1423 = vmax.f32 %v1414, %v1342
  %v1424 = vmax.f32 %v1414, %v1344
  %v1425 = vmax.f32 %v1414, %v1348
  %v1426 = vmax.f32 %v1414, %v1350
  %v1427 = vmax.f32 %v1414, %v1354
  %v1428 = vmax.f32 %v1414, %v1356
  %v1429 = vmax.f32 %v1414, %v1360
  %v1430 = vmax.f32 %v1414, %v1362
  %v1431 = vmax.f32 %v1414, %v1366
  %v1432 = vmax.f32 %v1414, %v1368
  %v1433 = vmax.f32 %v1414, %v1372
  %v1434 = vmax.f32 %v1414, %v1374
  %v1435 = vmax.f32 %v1414, %v1378
  %v1436 = vmax.f32 %v1414, %v1380
  %v1437 = vmax.f32 %v1414, %v1384
  %v1438 = vmax.f32 %v1414, %v1386
  %v1439 = vmax.f32 %v1414, %v1390
  %v1440 = vmax.f32 %v1414, %v1392
  %v1441 = vmax.f32 %v1414, %v1396
  %v1442 = vmax.f32 %v1414, %v1398
  %v1443 = vmax.f32 %v1414, %v1402
  %v1444 = vmax.f32 %v1414, %v1404
  %v1445 = vmax.f32 %v1414, %v1408
  %v1446 = vmax.f32 %v1414, %v1410
  %v1447 = vstv %s1412
  %v1448 = vmin.f32 %v1447, %v1415
  %v1449 = vmin.f32 %v1447, %v1416
  %v1450 = vmin.f32 %v1447, %v1417
  %v1451 = vmin.f32 %v1447, %v1418
  %v1452 = vmin.f32 %v1447, %v1419
  %v1453 = vmin.f32 %v1447, %v1420
  %v1454 = vmin.f32 %v1447, %v1421
  %v1455 = vmin.f32 %v1447, %v1422
  %v1456 = vmin.f32 %v1447, %v1423
  %v1457 = vmin.f32 %v1447, %v1424
  %v1458 = vmin.f32 %v1447, %v1425
  %v1459 = vmin.f32 %v1447, %v1426
  %v1460 = vmin.f32 %v1447, %v1427
  %v1461 = vmin.f32 %v1447, %v1428
  %v1462 = vmin.f32 %v1447, %v1429
  %v1463 = vmin.f32 %v1447, %v1430
  %v1464 = vmin.f32 %v1447, %v1431
  %v1465 = vmin.f32 %v1447, %v1432
  %v1466 = vmin.f32 %v1447, %v1433
  %v1467 = vmin.f32 %v1447, %v1434
  %v1468 = vmin.f32 %v1447, %v1435
  %v1469 = vmin.f32 %v1447, %v1436
  %v1470 = vmin.f32 %v1447, %v1437
  %v1471 = vmin.f32 %v1447, %v1438
  %v1472 = vmin.f32 %v1447, %v1439
  %v1473 = vmin.f32 %v1447, %v1440
  %v1474 = vmin.f32 %v1447, %v1441
  %v1475 = vmin.f32 %v1447, %v1442
  %v1476 = vmin.f32 %v1447, %v1443
  %v1477 = vmin.f32 %v1447, %v1444
  %v1478 = vmin.f32 %v1447, %v1445
  %v1479 = vmin.f32 %v1447, %v1446
  %v1480 = vsub.f32 %v1318, %v1448
  %v1481 = vsub.f32 %v1320, %v1449
  %v1482 = vsub.f32 %v1324, %v1450
  %v1483 = vsub.f32 %v1326, %v1451
  %v1484 = vsub.f32 %v1330, %v1452
  %v1485 = vsub.f32 %v1332, %v1453
  %v1486 = vsub.f32 %v1336, %v1454
  %v1487 = vsub.f32 %v1338, %v1455
  %v1488 = vsub.f32 %v1342, %v1456
  %v1489 = vsub.f32 %v1344, %v1457
  %v1490 = vsub.f32 %v1348, %v1458
  %v1491 = vsub.f32 %v1350, %v1459
  %v1492 = vsub.f32 %v1354, %v1460
  %v1493 = vsub.f32 %v1356, %v1461
  %v1494 = vsub.f32 %v1360, %v1462
  %v1495 = vsub.f32 %v1362, %v1463
  %v1496 = vsub.f32 %v1366, %v1464
  %v1497 = vsub.f32 %v1368, %v1465
  %v1498 = vsub.f32 %v1372, %v1466
  %v1499 = vsub.f32 %v1374, %v1467
  %v1500 = vsub.f32 %v1378, %v1468
  %v1501 = vsub.f32 %v1380, %v1469
  %v1502 = vsub.f32 %v1384, %v1470
  %v1503 = vsub.f32 %v1386, %v1471
  %v1504 = vsub.f32 %v1390, %v1472
  %v1505 = vsub.f32 %v1392, %v1473
  %v1506 = vsub.f32 %v1396, %v1474
  %v1507 = vsub.f32 %v1398, %v1475
  %v1508 = vsub.f32 %v1402, %v1476
  %v1509 = vsub.f32 %v1404, %v1477
  %v1510 = vsub.f32 %v1408, %v1478
  %v1511 = vsub.f32 %v1410, %v1479
  %1512 = vst [vmem:[%s4] sm:$0xff] %v1480
  %1513 = vst [vmem:[%s4 + $0x8] sm:$0xff] %v1481
  %1514 = vst [vmem:[%s4 + $0x10] sm:$0xff] %v1482
  %1515 = vst [vmem:[%s4 + $0x18] sm:$0xff] %v1483
  %1516 = vst [vmem:[%s4 + $0x20] sm:$0xff] %v1484
  %1517 = vst [vmem:[%s4 + $0x28] sm:$0xff] %v1485
  %1518 = vst [vmem:[%s4 + $0x30] sm:$0xff] %v1486
  %1519 = vst [vmem:[%s4 + $0x38] sm:$0xff] %v1487
  %1520 = vst [vmem:[%s4 + $0x40] sm:$0xff] %v1488
  %1521 = vst [vmem:[%s4 + $0x48] sm:$0xff] %v1489
  %1522 = vst [vmem:[%s4 + $0x50] sm:$0xff] %v1490
  %1523 = vst [vmem:[%s4 + $0x58] sm:$0xff] %v1491
  %1524 = vst [vmem:[%s4 + $0x60] sm:$0xff] %v1492
  %1525 = vst [vmem:[%s4 + $0x68] sm:$0xff] %v1493
  %1526 = vst [vmem:[%s4 + $0x70] sm:$0xff] %v1494
  %1527 = vst [vmem:[%s4 + $0x78] sm:$0xff] %v1495
  %1528 = vst [vmem:[%s4 + $0x80] sm:$0xff] %v1496
  %1529 = vst [vmem:[%s4 + $0x88] sm:$0xff] %v1497
  %1530 = vst [vmem:[%s4 + $0x90] sm:$0xff] %v1498
  %1531 = vst [vmem:[%s4 + $0x98] sm:$0xff] %v1499
  %1532 = vst [vmem:[%s4 + $0xa0] sm:$0xff] %v1500
  %1533 = vst [vmem:[%s4 + $0xa8] sm:$0xff] %v1501
  %1534 = vst [vmem:[%s4 + $0xb0] sm:$0xff] %v1502
  %1535 = vst [vmem:[%s4 + $0xb8] sm:$0xff] %v1503
  %1536 = vst [vmem:[%s4 + $0xc0] sm:$0xff] %v1504
  %1537 = vst [vmem:[%s4 + $0xc8] sm:$0xff] %v1505
  %1538 = vst [vmem:[%s4 + $0xd0] sm:$0xff] %v1506
  %1539 = vst [vmem:[%s4 + $0xd8] sm:$0xff] %v1507
  %1540 = vst [vmem:[%s4 + $0xe0] sm:$0xff] %v1508
  %1541 = vst [vmem:[%s4 + $0xe8] sm:$0xff] %v1509
  %1542 = vst [vmem:[%s4 + $0xf0] sm:$0xff] %v1510
  %1543 = vst [vmem:[%s4 + $0xf8] sm:$0xff] %v1511
  // Predicated region
  $region14: #{lista_forward.1} parent=0 // pred_check
    _
  $region15: #{lista_forward.1} parent=0 // pred_check_branch
    %1545 = sbr.rel (0) target = $region17
  $region16: #{lista_forward.1} parent=0 // pred_region
    _
  $region17: #{lista_forward.1} parent=0 // pred_fallthru
    _
  // Predicated region
  $region18: #{lista_forward.1} parent=0 // pred_check
    _
  $region19: #{lista_forward.1} parent=0 // pred_check_branch
    %1547 = sbr.rel (0) target = $region21
  $region20: #{lista_forward.1} parent=0 // pred_region
    _
  $region21: #{lista_forward.1} parent=0 // pred_fallthru
    _

</llo_original>
